<compile_context>
chip_gen: v7x
topology: tpu7x:2x2x1
jax: 0.10.0
libtpu: 0.0.40
codegen_flags: <defaults>
</compile_context>

<pallas_src>
from functools import partial

import jax
import jax.numpy as jnp
from jax.experimental import pallas as pl
from jax.experimental.pallas import tpu as pltpu

EMBED_SIZE = 64
HIDDEN_SIZE = 128


def lstm_policy_kernel(pg_ref, mask_ref, whh_ref, wfc_ref, bfc_ref, out_ref):
    """pg_ref:   (T, B, 4H) f32  pre-computed gate pre-activations (i,f,o,g order)
       mask_ref: (T, B, 1)  f32  1.0 while t < length(b), else 0.0
       whh_ref:  (H, 4H)    bf16
       wfc_ref:  (H, Vpad)  bf16
       bfc_ref:  (1, Vpad)  f32
       out_ref:  (B, Vpad)  f32
    """
    T, B, _ = pg_ref.shape
    H = whh_ref.shape[0]

    # Mask loaded + compared once; sliced with static indices inside the
    # unrolled loop (no per-step load / compare / broadcast).
    live_all = mask_ref[...] > 0.5                              # (T, B, 1) bool

    # State lives in loop carries (vregs), not VMEM scratch.
    h = jnp.zeros((B, H), jnp.float32)
    c = jnp.zeros((B, H), jnp.float32)
    h_b = h.astype(whh_ref.dtype)                               # bf16 copy for MXU

    for t in range(T):                                          # static, fully unrolled
        gates = pg_ref[t]                                       # (B, 4H) f32
        if t > 0:
            # Step 0: h == 0, recurrent matmul contributes nothing -> skipped.
            gates = gates + jnp.dot(h_b, whh_ref[...],
                                    preferred_element_type=jnp.float32)
        sig = jax.nn.sigmoid(gates[:, :3 * H])                  # i, f, o in one EUP pass
        g_g = jnp.tanh(gates[:, 3 * H:])                        # g
        i_g = sig[:, 0:H]
        f_g = sig[:, H:2 * H]
        o_g = sig[:, 2 * H:3 * H]
        c_new = f_g * c + i_g * g_g
        h_new = o_g * jnp.tanh(c_new)
        live = live_all[t]                                      # (B, 1) bool, static slice
        h = jnp.where(live, h_new, h)
        c = jnp.where(live, c_new, c)
        # Cast for next step's MXU feed in this step's epilogue (v5e critical path).
        h_b = h.astype(whh_ref.dtype)

    logits = jnp.dot(h_b, wfc_ref[...],
                     preferred_element_type=jnp.float32) + bfc_ref[...]
    valid = live_all[0]                                         # length > 0
    out_ref[...] = jnp.where(valid, logits, 0.0)


def _xavier_uniform(key, shape):
    fan_out, fan_in = shape
    bound = jnp.sqrt(6.0 / (fan_in + fan_out))
    return jax.random.uniform(key, shape, jnp.float32, -bound, bound)


def init_policy_params(key, vocab_size,
                       embed_size=EMBED_SIZE, hidden_size=HIDDEN_SIZE):
    # Matches the PyTorch module's explicit init: xavier_uniform_ on matrices,
    # zeros on biases, N(0,1) embedding with the padding row zeroed.
    k_emb, k_ih, k_hh, k_fc = jax.random.split(key, 4)
    embed = jax.random.normal(k_emb, (vocab_size, embed_size), jnp.float32)
    embed = embed.at[0].set(0.0)                                  # padding_idx=0
    w_ih = _xavier_uniform(k_ih, (4 * hidden_size, embed_size))   # PyTorch (i,f,g,o)
    w_hh = _xavier_uniform(k_hh, (4 * hidden_size, hidden_size))
    b_ih = jnp.zeros((4 * hidden_size,), jnp.float32)
    b_hh = jnp.zeros((4 * hidden_size,), jnp.float32)
    w_fc = _xavier_uniform(k_fc, (vocab_size - 1, hidden_size))
    b_fc = jnp.zeros((vocab_size - 1,), jnp.float32)
    return dict(embed=embed, w_ih=w_ih, w_hh=w_hh, b_ih=b_ih, b_hh=b_hh,
                w_fc=w_fc, b_fc=b_fc)


def prepare_policy_params(params):
    """One-time, seq-independent parameter prep (run once per weight update)."""
    H = params["w_hh"].shape[1]
    V_out = params["w_fc"].shape[0]
    V_pad = ((V_out + 127) // 128) * 128

    # Reorder PyTorch gate layout (i, f, g, o) -> kernel layout (i, f, o, g).
    perm = jnp.concatenate([jnp.arange(0, H), jnp.arange(H, 2 * H),
                            jnp.arange(3 * H, 4 * H), jnp.arange(2 * H, 3 * H)])
    w_ih = params["w_ih"][perm]                                  # (4H, E)
    w_hh = params["w_hh"][perm]                                  # (4H, H)
    bias = (params["b_ih"] + params["b_hh"])[perm]               # (4H,)

    # Hoisted input projection fused with the embedding gather:
    #   gate_table[v] = W_ih @ embed[v] + bias   (exact algebraic rewrite)
    gate_table = (params["embed"] @ w_ih.T + bias[None, :]).astype(jnp.float32)

    whh_t = w_hh.T.astype(jnp.bfloat16)                          # (H, 4H)
    wfc_t = jnp.pad(params["w_fc"].T,
                    ((0, 0), (0, V_pad - V_out))).astype(jnp.bfloat16)  # (H, Vpad)
    bfc = jnp.pad(params["b_fc"], (0, V_pad - V_out))[None, :]   # (1, Vpad) f32

    return dict(gate_table=gate_table, whh_t=whh_t, wfc_t=wfc_t, bfc=bfc,
                v_out=int(V_out))


@partial(jax.jit, static_argnames=("v_out",))
def _policy_forward_jit(gate_table, whh_t, wfc_t, bfc, tokens, *, v_out):
    B, T = tokens.shape
    V_pad = wfc_t.shape[1]
    B_pad = ((B + 7) // 8) * 8

    # Pad batch to fill the 8 f32 sublanes; padded rows are all-padding tokens
    # (length 0), masked inside the kernel and sliced off below.
    tok = jnp.pad(tokens, ((0, B_pad - B), (0, 0)))

    # Token gather from the precomputed gate table, time-major.
    pre_gates = jnp.take(gate_table, tok.T, axis=0)              # (T, B_pad, 4H) f32

    # Time-major validity mask (trailing padding assumed, as in the original).
    lengths = jnp.sum((tok != 0).astype(jnp.int32), axis=1)      # (B_pad,)
    mask = (jnp.arange(T, dtype=jnp.int32)[:, None] < lengths[None, :])
    mask = mask.astype(jnp.float32)[..., None]                   # (T, B_pad, 1)

    out = pl.pallas_call(
        lstm_policy_kernel,
        out_shape=jax.ShapeDtypeStruct((B_pad, V_pad), jnp.float32),
        in_specs=[pl.BlockSpec(memory_space=pltpu.MemorySpace.VMEM)] * 5,
        out_specs=pl.BlockSpec(memory_space=pltpu.MemorySpace.VMEM),
    )(pre_gates, mask, whh_t, wfc_t, bfc)

    return out[:B, :v_out]


def policy_forward(prepped, seq):
    """prepped: output of prepare_policy_params(params)."""
    t = jnp.asarray(seq, jnp.int32)
    squeeze = (t.ndim == 1)
    if squeeze:
        t = t[None, :]
    out = _policy_forward_jit(prepped["gate_table"], prepped["whh_t"],
                              prepped["wfc_t"], prepped["bfc"], t,
                              v_out=prepped["v_out"])
    return out[0] if squeeze else out


def _policy_forward_ref(params, seq):
    """Pure-JAX f32 reference of the PyTorch forward (for a sanity check)."""
    t = jnp.asarray(seq, jnp.int32)
    squeeze = (t.ndim == 1)
    if squeeze:
        t = t[None, :]
    B, T = t.shape
    H = params["w_hh"].shape[1]
    lengths = jnp.sum((t != 0).astype(jnp.int32), axis=1)
    emb = jnp.take(params["embed"], t, axis=0)                   # (B, T, E)
    bias = params["b_ih"] + params["b_hh"]
    h = jnp.zeros((B, H), jnp.float32)
    c = jnp.zeros((B, H), jnp.float32)
    for step in range(T):
        gates = emb[:, step] @ params["w_ih"].T + h @ params["w_hh"].T + bias
        i_g = jax.nn.sigmoid(gates[:, 0:H])
        f_g = jax.nn.sigmoid(gates[:, H:2 * H])
        g_g = jnp.tanh(gates[:, 2 * H:3 * H])
        o_g = jax.nn.sigmoid(gates[:, 3 * H:4 * H])
        c_new = f_g * c + i_g * g_g
        h_new = o_g * jnp.tanh(c_new)
        m = (lengths > step)[:, None]
        h = jnp.where(m, h_new, h)
        c = jnp.where(m, c_new, c)
    out = h @ params["w_fc"].T + params["b_fc"][None, :]
    out = jnp.where((lengths > 0)[:, None], out, 0.0)
    return out[0] if squeeze else out


if __name__ == "__main__":
    key = jax.random.PRNGKey(0)
    vocab_size = 10                      # -> fc output dim = 9
    B, T = 2, 8

    params = init_policy_params(key, vocab_size)
    prepped = prepare_policy_params(params)   # one-time, cached with the weights

    # deterministic small batch: one full-length seq, one padded (trailing zeros)
    k_seq = jax.random.PRNGKey(0)
    seq = jax.random.randint(k_seq, (B, T), 1, vocab_size, dtype=jnp.int32)
    seq = seq.at[1, 5:].set(0)           # second sequence has length 5

    out = policy_forward(prepped, seq)
    jax.block_until_ready(out)
    assert out.shape == (B, vocab_size - 1)

    # loose tolerance: kernel runs W_hh / W_fc matmuls in bf16 (f32 accumulate)
    ref = _policy_forward_ref(params, seq)
    assert jnp.allclose(out, ref, atol=0.1, rtol=0.1), (out, ref)

    # 1-D input path (returns squeezed (V-1,) vector, like the PyTorch module)
    out1 = policy_forward(prepped, seq[0])
    jax.block_until_ready(out1)
    assert out1.shape == (vocab_size - 1,)

    print("KERNEL_OK")
</pallas_src>

<mosaic_0001>
module attributes {stable_mosaic.version = 11 : i64} {
  func.func @lstm_policy_kernel(%arg0: memref<8x8x512xf32, #tpu.memory_space<vmem>>, %arg1: memref<8x8x1xf32, #tpu.memory_space<vmem>>, %arg2: memref<128x512xbf16, #tpu.memory_space<vmem>>, %arg3: memref<128x128xbf16, #tpu.memory_space<vmem>>, %arg4: memref<1x128xf32, #tpu.memory_space<vmem>>, %arg5: memref<8x128xf32, #tpu.memory_space<vmem>>) attributes {dimension_semantics = [], scalar_prefetch = 0 : i64, scratch_operands = 0 : i64, tpu.core_type = #tpu.core_type<tc>} {
    %c0 = arith.constant 0 : index
    %c0_0 = arith.constant 0 : index
    %c0_1 = arith.constant 0 : index
    %0 = vector.load %arg1[%c0, %c0_0, %c0_1] : memref<8x8x1xf32, #tpu.memory_space<vmem>>, vector<8x8x1xf32>
    %cst = arith.constant 5.000000e-01 : f32
    %1 = vector.broadcast %cst : f32 to vector<8x8x1xf32>
    %2 = arith.cmpf ogt, %0, %1 : vector<8x8x1xf32>
    %cst_2 = arith.constant 0.000000e+00 : f32
    %3 = vector.broadcast %cst_2 : f32 to vector<8x128xf32>
    %cst_3 = arith.constant 0.000000e+00 : f32
    %4 = vector.broadcast %cst_3 : f32 to vector<8x128xf32>
    %c0_4 = arith.constant 0 : index
    %c0_5 = arith.constant 0 : index
    %c0_6 = arith.constant 0 : index
    %5 = vector.load %arg0[%c0_4, %c0_5, %c0_6] : memref<8x8x512xf32, #tpu.memory_space<vmem>>, vector<1x8x512xf32>
    %6 = vector.shape_cast %5 : vector<1x8x512xf32> to vector<8x512xf32>
    %7 = vector.extract_strided_slice %6 {offsets = [0, 0], sizes = [8, 384], strides = [1, 1]} : vector<8x512xf32> to vector<8x384xf32>
    %8 = arith.negf %7 : vector<8x384xf32>
    %9 = math.exp %8 : vector<8x384xf32>
    %cst_7 = arith.constant 1.000000e+00 : f32
    %10 = vector.broadcast %cst_7 : f32 to vector<8x384xf32>
    %11 = arith.addf %10, %9 : vector<8x384xf32>
    %12 = arith.divf %10, %11 : vector<8x384xf32>
    %13 = vector.extract_strided_slice %6 {offsets = [0, 384], sizes = [8, 128], strides = [1, 1]} : vector<8x512xf32> to vector<8x128xf32>
    %14 = math.tanh %13 : vector<8x128xf32>
    %15 = vector.extract_strided_slice %12 {offsets = [0, 0], sizes = [8, 128], strides = [1, 1]} : vector<8x384xf32> to vector<8x128xf32>
    %16 = vector.extract_strided_slice %12 {offsets = [0, 128], sizes = [8, 128], strides = [1, 1]} : vector<8x384xf32> to vector<8x128xf32>
    %17 = vector.extract_strided_slice %12 {offsets = [0, 256], sizes = [8, 128], strides = [1, 1]} : vector<8x384xf32> to vector<8x128xf32>
    %18 = arith.mulf %16, %4 : vector<8x128xf32>
    %19 = arith.mulf %15, %14 : vector<8x128xf32>
    %20 = arith.addf %18, %19 : vector<8x128xf32>
    %21 = math.tanh %20 : vector<8x128xf32>
    %22 = arith.mulf %17, %21 : vector<8x128xf32>
    %23 = vector.extract_strided_slice %2 {offsets = [0, 0, 0], sizes = [1, 8, 1], strides = [1, 1, 1]} : vector<8x8x1xi1> to vector<1x8x1xi1>
    %24 = vector.shape_cast %23 : vector<1x8x1xi1> to vector<8x1xi1>
    %25 = vector.shape_cast %24 : vector<8x1xi1> to vector<8x1xi1>
    %26 = vector.broadcast %25 : vector<8x1xi1> to vector<8x128xi1>
    %27 = arith.select %26, %22, %3 : vector<8x128xi1>, vector<8x128xf32>
    %28 = vector.shape_cast %24 : vector<8x1xi1> to vector<8x1xi1>
    %29 = vector.broadcast %28 : vector<8x1xi1> to vector<8x128xi1>
    %30 = arith.select %29, %20, %4 : vector<8x128xi1>, vector<8x128xf32>
    %31 = arith.truncf %27 : vector<8x128xf32> to vector<8x128xbf16>
    %c1 = arith.constant 1 : index
    %c0_8 = arith.constant 0 : index
    %c0_9 = arith.constant 0 : index
    %32 = vector.load %arg0[%c1, %c0_8, %c0_9] : memref<8x8x512xf32, #tpu.memory_space<vmem>>, vector<1x8x512xf32>
    %33 = vector.shape_cast %32 : vector<1x8x512xf32> to vector<8x512xf32>
    %c0_10 = arith.constant 0 : index
    %c0_11 = arith.constant 0 : index
    %34 = vector.load %arg2[%c0_10, %c0_11] : memref<128x512xbf16, #tpu.memory_space<vmem>>, vector<128x512xbf16>
    %cst_12 = arith.constant dense<0.000000e+00> : vector<8x512xf32>
    %35 = tpu.matmul %31, %34, %cst_12 {dimension_numbers = #tpu.dot_dimension_numbers<[1], [0], [0], [1], [0, 0, 1, 1], [], []>} : vector<8x128xbf16>, vector<128x512xbf16>, vector<8x512xf32> -> vector<8x512xf32>
    %36 = arith.addf %33, %35 : vector<8x512xf32>
    %37 = vector.extract_strided_slice %36 {offsets = [0, 0], sizes = [8, 384], strides = [1, 1]} : vector<8x512xf32> to vector<8x384xf32>
    %38 = arith.negf %37 : vector<8x384xf32>
    %39 = math.exp %38 : vector<8x384xf32>
    %cst_13 = arith.constant 1.000000e+00 : f32
    %40 = vector.broadcast %cst_13 : f32 to vector<8x384xf32>
    %41 = arith.addf %40, %39 : vector<8x384xf32>
    %42 = arith.divf %40, %41 : vector<8x384xf32>
    %43 = vector.extract_strided_slice %36 {offsets = [0, 384], sizes = [8, 128], strides = [1, 1]} : vector<8x512xf32> to vector<8x128xf32>
    %44 = math.tanh %43 : vector<8x128xf32>
    %45 = vector.extract_strided_slice %42 {offsets = [0, 0], sizes = [8, 128], strides = [1, 1]} : vector<8x384xf32> to vector<8x128xf32>
    %46 = vector.extract_strided_slice %42 {offsets = [0, 128], sizes = [8, 128], strides = [1, 1]} : vector<8x384xf32> to vector<8x128xf32>
    %47 = vector.extract_strided_slice %42 {offsets = [0, 256], sizes = [8, 128], strides = [1, 1]} : vector<8x384xf32> to vector<8x128xf32>
    %48 = arith.mulf %46, %30 : vector<8x128xf32>
    %49 = arith.mulf %45, %44 : vector<8x128xf32>
    %50 = arith.addf %48, %49 : vector<8x128xf32>
    %51 = math.tanh %50 : vector<8x128xf32>
    %52 = arith.mulf %47, %51 : vector<8x128xf32>
    %53 = vector.extract_strided_slice %2 {offsets = [1, 0, 0], sizes = [1, 8, 1], strides = [1, 1, 1]} : vector<8x8x1xi1> to vector<1x8x1xi1>
    %54 = vector.shape_cast %53 : vector<1x8x1xi1> to vector<8x1xi1>
    %55 = vector.shape_cast %54 : vector<8x1xi1> to vector<8x1xi1>
    %56 = vector.broadcast %55 : vector<8x1xi1> to vector<8x128xi1>
    %57 = arith.select %56, %52, %27 : vector<8x128xi1>, vector<8x128xf32>
    %58 = vector.shape_cast %54 : vector<8x1xi1> to vector<8x1xi1>
    %59 = vector.broadcast %58 : vector<8x1xi1> to vector<8x128xi1>
    %60 = arith.select %59, %50, %30 : vector<8x128xi1>, vector<8x128xf32>
    %61 = arith.truncf %57 : vector<8x128xf32> to vector<8x128xbf16>
    %c2 = arith.constant 2 : index
    %c0_14 = arith.constant 0 : index
    %c0_15 = arith.constant 0 : index
    %62 = vector.load %arg0[%c2, %c0_14, %c0_15] : memref<8x8x512xf32, #tpu.memory_space<vmem>>, vector<1x8x512xf32>
    %63 = vector.shape_cast %62 : vector<1x8x512xf32> to vector<8x512xf32>
    %c0_16 = arith.constant 0 : index
    %c0_17 = arith.constant 0 : index
    %64 = vector.load %arg2[%c0_16, %c0_17] : memref<128x512xbf16, #tpu.memory_space<vmem>>, vector<128x512xbf16>
    %cst_18 = arith.constant dense<0.000000e+00> : vector<8x512xf32>
    %65 = tpu.matmul %61, %64, %cst_18 {dimension_numbers = #tpu.dot_dimension_numbers<[1], [0], [0], [1], [0, 0, 1, 1], [], []>} : vector<8x128xbf16>, vector<128x512xbf16>, vector<8x512xf32> -> vector<8x512xf32>
    %66 = arith.addf %63, %65 : vector<8x512xf32>
    %67 = vector.extract_strided_slice %66 {offsets = [0, 0], sizes = [8, 384], strides = [1, 1]} : vector<8x512xf32> to vector<8x384xf32>
    %68 = arith.negf %67 : vector<8x384xf32>
    %69 = math.exp %68 : vector<8x384xf32>
    %cst_19 = arith.constant 1.000000e+00 : f32
    %70 = vector.broadcast %cst_19 : f32 to vector<8x384xf32>
    %71 = arith.addf %70, %69 : vector<8x384xf32>
    %72 = arith.divf %70, %71 : vector<8x384xf32>
    %73 = vector.extract_strided_slice %66 {offsets = [0, 384], sizes = [8, 128], strides = [1, 1]} : vector<8x512xf32> to vector<8x128xf32>
    %74 = math.tanh %73 : vector<8x128xf32>
    %75 = vector.extract_strided_slice %72 {offsets = [0, 0], sizes = [8, 128], strides = [1, 1]} : vector<8x384xf32> to vector<8x128xf32>
    %76 = vector.extract_strided_slice %72 {offsets = [0, 128], sizes = [8, 128], strides = [1, 1]} : vector<8x384xf32> to vector<8x128xf32>
    %77 = vector.extract_strided_slice %72 {offsets = [0, 256], sizes = [8, 128], strides = [1, 1]} : vector<8x384xf32> to vector<8x128xf32>
    %78 = arith.mulf %76, %60 : vector<8x128xf32>
    %79 = arith.mulf %75, %74 : vector<8x128xf32>
    %80 = arith.addf %78, %79 : vector<8x128xf32>
    %81 = math.tanh %80 : vector<8x128xf32>
    %82 = arith.mulf %77, %81 : vector<8x128xf32>
    %83 = vector.extract_strided_slice %2 {offsets = [2, 0, 0], sizes = [1, 8, 1], strides = [1, 1, 1]} : vector<8x8x1xi1> to vector<1x8x1xi1>
    %84 = vector.shape_cast %83 : vector<1x8x1xi1> to vector<8x1xi1>
    %85 = vector.shape_cast %84 : vector<8x1xi1> to vector<8x1xi1>
    %86 = vector.broadcast %85 : vector<8x1xi1> to vector<8x128xi1>
    %87 = arith.select %86, %82, %57 : vector<8x128xi1>, vector<8x128xf32>
    %88 = vector.shape_cast %84 : vector<8x1xi1> to vector<8x1xi1>
    %89 = vector.broadcast %88 : vector<8x1xi1> to vector<8x128xi1>
    %90 = arith.select %89, %80, %60 : vector<8x128xi1>, vector<8x128xf32>
    %91 = arith.truncf %87 : vector<8x128xf32> to vector<8x128xbf16>
    %c3 = arith.constant 3 : index
    %c0_20 = arith.constant 0 : index
    %c0_21 = arith.constant 0 : index
    %92 = vector.load %arg0[%c3, %c0_20, %c0_21] : memref<8x8x512xf32, #tpu.memory_space<vmem>>, vector<1x8x512xf32>
    %93 = vector.shape_cast %92 : vector<1x8x512xf32> to vector<8x512xf32>
    %c0_22 = arith.constant 0 : index
    %c0_23 = arith.constant 0 : index
    %94 = vector.load %arg2[%c0_22, %c0_23] : memref<128x512xbf16, #tpu.memory_space<vmem>>, vector<128x512xbf16>
    %cst_24 = arith.constant dense<0.000000e+00> : vector<8x512xf32>
    %95 = tpu.matmul %91, %94, %cst_24 {dimension_numbers = #tpu.dot_dimension_numbers<[1], [0], [0], [1], [0, 0, 1, 1], [], []>} : vector<8x128xbf16>, vector<128x512xbf16>, vector<8x512xf32> -> vector<8x512xf32>
    %96 = arith.addf %93, %95 : vector<8x512xf32>
    %97 = vector.extract_strided_slice %96 {offsets = [0, 0], sizes = [8, 384], strides = [1, 1]} : vector<8x512xf32> to vector<8x384xf32>
    %98 = arith.negf %97 : vector<8x384xf32>
    %99 = math.exp %98 : vector<8x384xf32>
    %cst_25 = arith.constant 1.000000e+00 : f32
    %100 = vector.broadcast %cst_25 : f32 to vector<8x384xf32>
    %101 = arith.addf %100, %99 : vector<8x384xf32>
    %102 = arith.divf %100, %101 : vector<8x384xf32>
    %103 = vector.extract_strided_slice %96 {offsets = [0, 384], sizes = [8, 128], strides = [1, 1]} : vector<8x512xf32> to vector<8x128xf32>
    %104 = math.tanh %103 : vector<8x128xf32>
    %105 = vector.extract_strided_slice %102 {offsets = [0, 0], sizes = [8, 128], strides = [1, 1]} : vector<8x384xf32> to vector<8x128xf32>
    %106 = vector.extract_strided_slice %102 {offsets = [0, 128], sizes = [8, 128], strides = [1, 1]} : vector<8x384xf32> to vector<8x128xf32>
    %107 = vector.extract_strided_slice %102 {offsets = [0, 256], sizes = [8, 128], strides = [1, 1]} : vector<8x384xf32> to vector<8x128xf32>
    %108 = arith.mulf %106, %90 : vector<8x128xf32>
    %109 = arith.mulf %105, %104 : vector<8x128xf32>
    %110 = arith.addf %108, %109 : vector<8x128xf32>
    %111 = math.tanh %110 : vector<8x128xf32>
    %112 = arith.mulf %107, %111 : vector<8x128xf32>
    %113 = vector.extract_strided_slice %2 {offsets = [3, 0, 0], sizes = [1, 8, 1], strides = [1, 1, 1]} : vector<8x8x1xi1> to vector<1x8x1xi1>
    %114 = vector.shape_cast %113 : vector<1x8x1xi1> to vector<8x1xi1>
    %115 = vector.shape_cast %114 : vector<8x1xi1> to vector<8x1xi1>
    %116 = vector.broadcast %115 : vector<8x1xi1> to vector<8x128xi1>
    %117 = arith.select %116, %112, %87 : vector<8x128xi1>, vector<8x128xf32>
    %118 = vector.shape_cast %114 : vector<8x1xi1> to vector<8x1xi1>
    %119 = vector.broadcast %118 : vector<8x1xi1> to vector<8x128xi1>
    %120 = arith.select %119, %110, %90 : vector<8x128xi1>, vector<8x128xf32>
    %121 = arith.truncf %117 : vector<8x128xf32> to vector<8x128xbf16>
    %c4 = arith.constant 4 : index
    %c0_26 = arith.constant 0 : index
    %c0_27 = arith.constant 0 : index
    %122 = vector.load %arg0[%c4, %c0_26, %c0_27] : memref<8x8x512xf32, #tpu.memory_space<vmem>>, vector<1x8x512xf32>
    %123 = vector.shape_cast %122 : vector<1x8x512xf32> to vector<8x512xf32>
    %c0_28 = arith.constant 0 : index
    %c0_29 = arith.constant 0 : index
    %124 = vector.load %arg2[%c0_28, %c0_29] : memref<128x512xbf16, #tpu.memory_space<vmem>>, vector<128x512xbf16>
    %cst_30 = arith.constant dense<0.000000e+00> : vector<8x512xf32>
    %125 = tpu.matmul %121, %124, %cst_30 {dimension_numbers = #tpu.dot_dimension_numbers<[1], [0], [0], [1], [0, 0, 1, 1], [], []>} : vector<8x128xbf16>, vector<128x512xbf16>, vector<8x512xf32> -> vector<8x512xf32>
    %126 = arith.addf %123, %125 : vector<8x512xf32>
    %127 = vector.extract_strided_slice %126 {offsets = [0, 0], sizes = [8, 384], strides = [1, 1]} : vector<8x512xf32> to vector<8x384xf32>
    %128 = arith.negf %127 : vector<8x384xf32>
    %129 = math.exp %128 : vector<8x384xf32>
    %cst_31 = arith.constant 1.000000e+00 : f32
    %130 = vector.broadcast %cst_31 : f32 to vector<8x384xf32>
    %131 = arith.addf %130, %129 : vector<8x384xf32>
    %132 = arith.divf %130, %131 : vector<8x384xf32>
    %133 = vector.extract_strided_slice %126 {offsets = [0, 384], sizes = [8, 128], strides = [1, 1]} : vector<8x512xf32> to vector<8x128xf32>
    %134 = math.tanh %133 : vector<8x128xf32>
    %135 = vector.extract_strided_slice %132 {offsets = [0, 0], sizes = [8, 128], strides = [1, 1]} : vector<8x384xf32> to vector<8x128xf32>
    %136 = vector.extract_strided_slice %132 {offsets = [0, 128], sizes = [8, 128], strides = [1, 1]} : vector<8x384xf32> to vector<8x128xf32>
    %137 = vector.extract_strided_slice %132 {offsets = [0, 256], sizes = [8, 128], strides = [1, 1]} : vector<8x384xf32> to vector<8x128xf32>
    %138 = arith.mulf %136, %120 : vector<8x128xf32>
    %139 = arith.mulf %135, %134 : vector<8x128xf32>
    %140 = arith.addf %138, %139 : vector<8x128xf32>
    %141 = math.tanh %140 : vector<8x128xf32>
    %142 = arith.mulf %137, %141 : vector<8x128xf32>
    %143 = vector.extract_strided_slice %2 {offsets = [4, 0, 0], sizes = [1, 8, 1], strides = [1, 1, 1]} : vector<8x8x1xi1> to vector<1x8x1xi1>
    %144 = vector.shape_cast %143 : vector<1x8x1xi1> to vector<8x1xi1>
    %145 = vector.shape_cast %144 : vector<8x1xi1> to vector<8x1xi1>
    %146 = vector.broadcast %145 : vector<8x1xi1> to vector<8x128xi1>
    %147 = arith.select %146, %142, %117 : vector<8x128xi1>, vector<8x128xf32>
    %148 = vector.shape_cast %144 : vector<8x1xi1> to vector<8x1xi1>
    %149 = vector.broadcast %148 : vector<8x1xi1> to vector<8x128xi1>
    %150 = arith.select %149, %140, %120 : vector<8x128xi1>, vector<8x128xf32>
    %151 = arith.truncf %147 : vector<8x128xf32> to vector<8x128xbf16>
    %c5 = arith.constant 5 : index
    %c0_32 = arith.constant 0 : index
    %c0_33 = arith.constant 0 : index
    %152 = vector.load %arg0[%c5, %c0_32, %c0_33] : memref<8x8x512xf32, #tpu.memory_space<vmem>>, vector<1x8x512xf32>
    %153 = vector.shape_cast %152 : vector<1x8x512xf32> to vector<8x512xf32>
    %c0_34 = arith.constant 0 : index
    %c0_35 = arith.constant 0 : index
    %154 = vector.load %arg2[%c0_34, %c0_35] : memref<128x512xbf16, #tpu.memory_space<vmem>>, vector<128x512xbf16>
    %cst_36 = arith.constant dense<0.000000e+00> : vector<8x512xf32>
    %155 = tpu.matmul %151, %154, %cst_36 {dimension_numbers = #tpu.dot_dimension_numbers<[1], [0], [0], [1], [0, 0, 1, 1], [], []>} : vector<8x128xbf16>, vector<128x512xbf16>, vector<8x512xf32> -> vector<8x512xf32>
    %156 = arith.addf %153, %155 : vector<8x512xf32>
    %157 = vector.extract_strided_slice %156 {offsets = [0, 0], sizes = [8, 384], strides = [1, 1]} : vector<8x512xf32> to vector<8x384xf32>
    %158 = arith.negf %157 : vector<8x384xf32>
    %159 = math.exp %158 : vector<8x384xf32>
    %cst_37 = arith.constant 1.000000e+00 : f32
    %160 = vector.broadcast %cst_37 : f32 to vector<8x384xf32>
    %161 = arith.addf %160, %159 : vector<8x384xf32>
    %162 = arith.divf %160, %161 : vector<8x384xf32>
    %163 = vector.extract_strided_slice %156 {offsets = [0, 384], sizes = [8, 128], strides = [1, 1]} : vector<8x512xf32> to vector<8x128xf32>
    %164 = math.tanh %163 : vector<8x128xf32>
    %165 = vector.extract_strided_slice %162 {offsets = [0, 0], sizes = [8, 128], strides = [1, 1]} : vector<8x384xf32> to vector<8x128xf32>
    %166 = vector.extract_strided_slice %162 {offsets = [0, 128], sizes = [8, 128], strides = [1, 1]} : vector<8x384xf32> to vector<8x128xf32>
    %167 = vector.extract_strided_slice %162 {offsets = [0, 256], sizes = [8, 128], strides = [1, 1]} : vector<8x384xf32> to vector<8x128xf32>
    %168 = arith.mulf %166, %150 : vector<8x128xf32>
    %169 = arith.mulf %165, %164 : vector<8x128xf32>
    %170 = arith.addf %168, %169 : vector<8x128xf32>
    %171 = math.tanh %170 : vector<8x128xf32>
    %172 = arith.mulf %167, %171 : vector<8x128xf32>
    %173 = vector.extract_strided_slice %2 {offsets = [5, 0, 0], sizes = [1, 8, 1], strides = [1, 1, 1]} : vector<8x8x1xi1> to vector<1x8x1xi1>
    %174 = vector.shape_cast %173 : vector<1x8x1xi1> to vector<8x1xi1>
    %175 = vector.shape_cast %174 : vector<8x1xi1> to vector<8x1xi1>
    %176 = vector.broadcast %175 : vector<8x1xi1> to vector<8x128xi1>
    %177 = arith.select %176, %172, %147 : vector<8x128xi1>, vector<8x128xf32>
    %178 = vector.shape_cast %174 : vector<8x1xi1> to vector<8x1xi1>
    %179 = vector.broadcast %178 : vector<8x1xi1> to vector<8x128xi1>
    %180 = arith.select %179, %170, %150 : vector<8x128xi1>, vector<8x128xf32>
    %181 = arith.truncf %177 : vector<8x128xf32> to vector<8x128xbf16>
    %c6 = arith.constant 6 : index
    %c0_38 = arith.constant 0 : index
    %c0_39 = arith.constant 0 : index
    %182 = vector.load %arg0[%c6, %c0_38, %c0_39] : memref<8x8x512xf32, #tpu.memory_space<vmem>>, vector<1x8x512xf32>
    %183 = vector.shape_cast %182 : vector<1x8x512xf32> to vector<8x512xf32>
    %c0_40 = arith.constant 0 : index
    %c0_41 = arith.constant 0 : index
    %184 = vector.load %arg2[%c0_40, %c0_41] : memref<128x512xbf16, #tpu.memory_space<vmem>>, vector<128x512xbf16>
    %cst_42 = arith.constant dense<0.000000e+00> : vector<8x512xf32>
    %185 = tpu.matmul %181, %184, %cst_42 {dimension_numbers = #tpu.dot_dimension_numbers<[1], [0], [0], [1], [0, 0, 1, 1], [], []>} : vector<8x128xbf16>, vector<128x512xbf16>, vector<8x512xf32> -> vector<8x512xf32>
    %186 = arith.addf %183, %185 : vector<8x512xf32>
    %187 = vector.extract_strided_slice %186 {offsets = [0, 0], sizes = [8, 384], strides = [1, 1]} : vector<8x512xf32> to vector<8x384xf32>
    %188 = arith.negf %187 : vector<8x384xf32>
    %189 = math.exp %188 : vector<8x384xf32>
    %cst_43 = arith.constant 1.000000e+00 : f32
    %190 = vector.broadcast %cst_43 : f32 to vector<8x384xf32>
    %191 = arith.addf %190, %189 : vector<8x384xf32>
    %192 = arith.divf %190, %191 : vector<8x384xf32>
    %193 = vector.extract_strided_slice %186 {offsets = [0, 384], sizes = [8, 128], strides = [1, 1]} : vector<8x512xf32> to vector<8x128xf32>
    %194 = math.tanh %193 : vector<8x128xf32>
    %195 = vector.extract_strided_slice %192 {offsets = [0, 0], sizes = [8, 128], strides = [1, 1]} : vector<8x384xf32> to vector<8x128xf32>
    %196 = vector.extract_strided_slice %192 {offsets = [0, 128], sizes = [8, 128], strides = [1, 1]} : vector<8x384xf32> to vector<8x128xf32>
    %197 = vector.extract_strided_slice %192 {offsets = [0, 256], sizes = [8, 128], strides = [1, 1]} : vector<8x384xf32> to vector<8x128xf32>
    %198 = arith.mulf %196, %180 : vector<8x128xf32>
    %199 = arith.mulf %195, %194 : vector<8x128xf32>
    %200 = arith.addf %198, %199 : vector<8x128xf32>
    %201 = math.tanh %200 : vector<8x128xf32>
    %202 = arith.mulf %197, %201 : vector<8x128xf32>
    %203 = vector.extract_strided_slice %2 {offsets = [6, 0, 0], sizes = [1, 8, 1], strides = [1, 1, 1]} : vector<8x8x1xi1> to vector<1x8x1xi1>
    %204 = vector.shape_cast %203 : vector<1x8x1xi1> to vector<8x1xi1>
    %205 = vector.shape_cast %204 : vector<8x1xi1> to vector<8x1xi1>
    %206 = vector.broadcast %205 : vector<8x1xi1> to vector<8x128xi1>
    %207 = arith.select %206, %202, %177 : vector<8x128xi1>, vector<8x128xf32>
    %208 = vector.shape_cast %204 : vector<8x1xi1> to vector<8x1xi1>
    %209 = vector.broadcast %208 : vector<8x1xi1> to vector<8x128xi1>
    %210 = arith.select %209, %200, %180 : vector<8x128xi1>, vector<8x128xf32>
    %211 = arith.truncf %207 : vector<8x128xf32> to vector<8x128xbf16>
    %c7 = arith.constant 7 : index
    %c0_44 = arith.constant 0 : index
    %c0_45 = arith.constant 0 : index
    %212 = vector.load %arg0[%c7, %c0_44, %c0_45] : memref<8x8x512xf32, #tpu.memory_space<vmem>>, vector<1x8x512xf32>
    %213 = vector.shape_cast %212 : vector<1x8x512xf32> to vector<8x512xf32>
    %c0_46 = arith.constant 0 : index
    %c0_47 = arith.constant 0 : index
    %214 = vector.load %arg2[%c0_46, %c0_47] : memref<128x512xbf16, #tpu.memory_space<vmem>>, vector<128x512xbf16>
    %cst_48 = arith.constant dense<0.000000e+00> : vector<8x512xf32>
    %215 = tpu.matmul %211, %214, %cst_48 {dimension_numbers = #tpu.dot_dimension_numbers<[1], [0], [0], [1], [0, 0, 1, 1], [], []>} : vector<8x128xbf16>, vector<128x512xbf16>, vector<8x512xf32> -> vector<8x512xf32>
    %216 = arith.addf %213, %215 : vector<8x512xf32>
    %217 = vector.extract_strided_slice %216 {offsets = [0, 0], sizes = [8, 384], strides = [1, 1]} : vector<8x512xf32> to vector<8x384xf32>
    %218 = arith.negf %217 : vector<8x384xf32>
    %219 = math.exp %218 : vector<8x384xf32>
    %cst_49 = arith.constant 1.000000e+00 : f32
    %220 = vector.broadcast %cst_49 : f32 to vector<8x384xf32>
    %221 = arith.addf %220, %219 : vector<8x384xf32>
    %222 = arith.divf %220, %221 : vector<8x384xf32>
    %223 = vector.extract_strided_slice %216 {offsets = [0, 384], sizes = [8, 128], strides = [1, 1]} : vector<8x512xf32> to vector<8x128xf32>
    %224 = math.tanh %223 : vector<8x128xf32>
    %225 = vector.extract_strided_slice %222 {offsets = [0, 0], sizes = [8, 128], strides = [1, 1]} : vector<8x384xf32> to vector<8x128xf32>
    %226 = vector.extract_strided_slice %222 {offsets = [0, 128], sizes = [8, 128], strides = [1, 1]} : vector<8x384xf32> to vector<8x128xf32>
    %227 = vector.extract_strided_slice %222 {offsets = [0, 256], sizes = [8, 128], strides = [1, 1]} : vector<8x384xf32> to vector<8x128xf32>
    %228 = arith.mulf %226, %210 : vector<8x128xf32>
    %229 = arith.mulf %225, %224 : vector<8x128xf32>
    %230 = arith.addf %228, %229 : vector<8x128xf32>
    %231 = math.tanh %230 : vector<8x128xf32>
    %232 = arith.mulf %227, %231 : vector<8x128xf32>
    %233 = vector.extract_strided_slice %2 {offsets = [7, 0, 0], sizes = [1, 8, 1], strides = [1, 1, 1]} : vector<8x8x1xi1> to vector<1x8x1xi1>
    %234 = vector.shape_cast %233 : vector<1x8x1xi1> to vector<8x1xi1>
    %235 = vector.shape_cast %234 : vector<8x1xi1> to vector<8x1xi1>
    %236 = vector.broadcast %235 : vector<8x1xi1> to vector<8x128xi1>
    %237 = arith.select %236, %232, %207 : vector<8x128xi1>, vector<8x128xf32>
    %238 = arith.truncf %237 : vector<8x128xf32> to vector<8x128xbf16>
    %c0_50 = arith.constant 0 : index
    %c0_51 = arith.constant 0 : index
    %239 = vector.load %arg3[%c0_50, %c0_51] : memref<128x128xbf16, #tpu.memory_space<vmem>>, vector<128x128xbf16>
    %cst_52 = arith.constant dense<0.000000e+00> : vector<8x128xf32>
    %240 = tpu.matmul %238, %239, %cst_52 {dimension_numbers = #tpu.dot_dimension_numbers<[1], [0], [0], [1], [0, 0, 1, 1], [], []>} : vector<8x128xbf16>, vector<128x128xbf16>, vector<8x128xf32> -> vector<8x128xf32>
    %c0_53 = arith.constant 0 : index
    %c0_54 = arith.constant 0 : index
    %241 = vector.load %arg4[%c0_53, %c0_54] : memref<1x128xf32, #tpu.memory_space<vmem>>, vector<1x128xf32>
    %242 = vector.broadcast %241 : vector<1x128xf32> to vector<8x128xf32>
    %243 = arith.addf %240, %242 : vector<8x128xf32>
    %244 = vector.extract_strided_slice %2 {offsets = [0, 0, 0], sizes = [1, 8, 1], strides = [1, 1, 1]} : vector<8x8x1xi1> to vector<1x8x1xi1>
    %245 = vector.shape_cast %244 : vector<1x8x1xi1> to vector<8x1xi1>
    %cst_55 = arith.constant 0.000000e+00 : f32
    %246 = vector.shape_cast %245 : vector<8x1xi1> to vector<8x1xi1>
    %247 = vector.broadcast %246 : vector<8x1xi1> to vector<8x128xi1>
    %248 = vector.broadcast %cst_55 : f32 to vector<8x128xf32>
    %249 = arith.select %247, %243, %248 : vector<8x128xi1>, vector<8x128xf32>
    %c0_56 = arith.constant 0 : index
    %c0_57 = arith.constant 0 : index
    %250 = vector.load %arg5[%c0_56, %c0_57] : memref<8x128xf32, #tpu.memory_space<vmem>>, vector<8x128xf32>
    tpu.vector_store %arg5[%c0_56, %c0_57], %249 {strides = array<i32>} : memref<8x128xf32, #tpu.memory_space<vmem>>, vector<8x128xf32>,
    return
  }
}

</mosaic_0001>

<llo_original>
// kernel: _policy_forward_jit.1
$region0: #{_policy_forward_jit.1}
  #allocation0 [shape = 'u32[]', space=smem, size = 0x4, offset = 0x4, fixed_abs, tag = 'smem constant byte address 0x4 - core index']
  #allocation1 [shape = 'u32[144,128]{1,0:T(1,128)}', space=vmem, size = 0x12000, scoped, tag = 'internal scratch']
  %s0 = inlined_call_operand.vmem [shape: f32[8,8,512], index: 0, kind: input, shape index: {}]
  %s1 = inlined_call_operand.vmem [shape: f32[8,8,1], index: 1, kind: input, shape index: {}]
  %s2 = inlined_call_operand.vmem [shape: bf16[128,512], index: 2, kind: input, shape index: {}]
  %s3 = inlined_call_operand.vmem [shape: bf16[128,128], index: 3, kind: input, shape index: {}]
  %s4 = inlined_call_operand.vmem [shape: f32[1,128], index: 4, kind: input, shape index: {}]
  %s5 = inlined_call_operand.vmem [shape: f32[8,128], index: 5, kind: output, shape index: {}]
  %s6 = sld [smem:[#allocation0]]
  $region30: #{_policy_forward_jit.1} parent=0
    _
  %s8 = ssub.s32 1, %s6
  %s9 = scalar_select 0, %s8, %s6
  // Predicated region
  $region2: #{_policy_forward_jit.1} parent=0 // pred_check
    _
  $region3: #{_policy_forward_jit.1} parent=0 // pred_check_branch
    %11 = sbr.rel (0) target = $region5
  $region4: #{_policy_forward_jit.1} parent=0 // pred_region
    _
  $region5: #{_policy_forward_jit.1} parent=0 // pred_fallthru
    _
  // Predicated region
  $region6: #{_policy_forward_jit.1} parent=0 // pred_check
    _
  $region7: #{_policy_forward_jit.1} parent=0 // pred_check_branch
    %13 = sbr.rel (0) target = $region9
  $region8: #{_policy_forward_jit.1} parent=0 // pred_region
    _
  $region9: #{_policy_forward_jit.1} parent=0 // pred_fallthru
    _
  // Predicated region
  $region10: #{_policy_forward_jit.1} parent=0 // pred_check
    _
  $region11: #{_policy_forward_jit.1} parent=0 // pred_check_branch
    %15 = sbr.rel (0) target = $region13
  $region12: #{_policy_forward_jit.1} parent=0 // pred_region
    _
  $region13: #{_policy_forward_jit.1} parent=0 // pred_fallthru
    _
  // Predicated region
  $region14: #{_policy_forward_jit.1} parent=0 // pred_check
    _
  $region15: #{_policy_forward_jit.1} parent=0 // pred_check_branch
    %17 = sbr.rel (0) target = $region17
  $region16: #{_policy_forward_jit.1} parent=0 // pred_region
    _
  $region17: #{_policy_forward_jit.1} parent=0 // pred_fallthru
    _
  // Predicated region
  $region18: #{_policy_forward_jit.1} parent=0 // pred_check
    _
  $region19: #{_policy_forward_jit.1} parent=0 // pred_check_branch
    %19 = sbr.rel (0) target = $region21
  $region20: #{_policy_forward_jit.1} parent=0 // pred_region
    _
  $region21: #{_policy_forward_jit.1} parent=0 // pred_fallthru
    _
  %v21 = vld [vmem:[%s1] sm:$0xff]
  %v22 = vld [vmem:[%s1 + $0x8] sm:$0xff]
  %v23 = vld [vmem:[%s1 + $0x10] sm:$0xff]
  %v24 = vld [vmem:[%s1 + $0x18] sm:$0xff]
  %v25 = vld [vmem:[%s1 + $0x20] sm:$0xff]
  %v26 = vld [vmem:[%s1 + $0x28] sm:$0xff]
  %v27 = vld [vmem:[%s1 + $0x30] sm:$0xff]
  %v28 = vld [vmem:[%s1 + $0x38] sm:$0xff]
  %vm29 = vcmp.gt.f32.partialorder %v21, 0.5
  %vm30 = vcmp.gt.f32.partialorder %v22, 0.5
  %vm31 = vcmp.gt.f32.partialorder %v23, 0.5
  %vm32 = vcmp.gt.f32.partialorder %v24, 0.5
  %vm33 = vcmp.gt.f32.partialorder %v25, 0.5
  %vm34 = vcmp.gt.f32.partialorder %v26, 0.5
  %vm35 = vcmp.gt.f32.partialorder %v27, 0.5
  %vm36 = vcmp.gt.f32.partialorder %v28, 0.5
  %v37 = vld [vmem:[%s0] sm:$0xff]
  %v38 = vld [vmem:[%s0 + $0x8] sm:$0xff]
  %v39 = vld [vmem:[%s0 + $0x10] sm:$0xff]
  %v40 = vld [vmem:[%s0 + $0x18] sm:$0xff]
  %v41 = vxor.u32 %v37, 2147483648
  %v42 = vxor.u32 %v38, 2147483648
  %v43 = vxor.u32 %v39, 2147483648
  %v44 = vmul.f32 %v41, 1.442695
  %v45 = vpow.pop %v44
  %v46 = vmul.f32 %v42, 1.442695
  %v47 = vpow.pop %v46
  %v48 = vmul.f32 %v43, 1.442695
  %v49 = vpow.pop %v48
  %v50 = vadd.f32 %v45, 1.0
  %v51 = vadd.f32 %v47, 1.0
  %v52 = vadd.f32 %v49, 1.0
  %v53 = vrcp.pop %v50
  %v54 = vmul.f32 1.0, %v53
  %v55 = vrcp.pop %v51
  %v56 = vmul.f32 1.0, %v55
  %v57 = vrcp.pop %v52
  %v58 = vmul.f32 1.0, %v57
  %v59 = vtanh.pop %v40
  %v60 = vmul.f32 %v56, 0.0
  %v61 = vmul.f32 %v54, %v59
  %v62 = vadd.f32 %v60, %v61
  %v63 = vtanh.pop %v62
  %v64 = vmul.f32 %v58, %v63
  %v65 = vsel %vm29, 1, 0
  %66 = vset.pattern.permute.xlu0 0
  %67 = vperm.xlu0 %66, %v65
  %v68 = vpop.permute.xlu0 %67
  %vm69 = vcmp.eq.s32.totalorder %v68, 1
  %v70 = vsel %vm69, %v64, 0.0
  %v71 = vsel %vm69, %v62, 0.0
  %v72 = vpack.c.bf16 %v70, %v70
  %s73 = scalar_lea.vmem %s0, 32
  %v74 = vld [vmem:[%s73] sm:$0xff]
  %v75 = vld [vmem:[%s73 + $0x8] sm:$0xff]
  %v76 = vld [vmem:[%s73 + $0x10] sm:$0xff]
  %v77 = vld [vmem:[%s73 + $0x18] sm:$0xff]
  %v78 = vld [vmem:[%s2] sm:$0xff]
  %v79 = vld [vmem:[%s2 + $0x8] sm:$0xff]
  %v80 = vld [vmem:[%s2 + $0x10] sm:$0xff]
  %v81 = vld [vmem:[%s2 + $0x18] sm:$0xff]
  %v82 = vld [vmem:[%s2 + $0x20] sm:$0xff]
  %v83 = vld [vmem:[%s2 + $0x28] sm:$0xff]
  %v84 = vld [vmem:[%s2 + $0x30] sm:$0xff]
  %v85 = vld [vmem:[%s2 + $0x38] sm:$0xff]
  %v86 = vld [vmem:[%s2 + $0x40] sm:$0xff]
  %v87 = vld [vmem:[%s2 + $0x48] sm:$0xff]
  %v88 = vld [vmem:[%s2 + $0x50] sm:$0xff]
  %v89 = vld [vmem:[%s2 + $0x58] sm:$0xff]
  %v90 = vld [vmem:[%s2 + $0x60] sm:$0xff]
  %v91 = vld [vmem:[%s2 + $0x68] sm:$0xff]
  %v92 = vld [vmem:[%s2 + $0x70] sm:$0xff]
  %v93 = vld [vmem:[%s2 + $0x78] sm:$0xff]
  %v94 = vld [vmem:[%s2 + $0x80] sm:$0xff]
  %v95 = vld [vmem:[%s2 + $0x88] sm:$0xff]
  %v96 = vld [vmem:[%s2 + $0x90] sm:$0xff]
  %v97 = vld [vmem:[%s2 + $0x98] sm:$0xff]
  %v98 = vld [vmem:[%s2 + $0xa0] sm:$0xff]
  %v99 = vld [vmem:[%s2 + $0xa8] sm:$0xff]
  %v100 = vld [vmem:[%s2 + $0xb0] sm:$0xff]
  %v101 = vld [vmem:[%s2 + $0xb8] sm:$0xff]
  %v102 = vld [vmem:[%s2 + $0xc0] sm:$0xff]
  %v103 = vld [vmem:[%s2 + $0xc8] sm:$0xff]
  %v104 = vld [vmem:[%s2 + $0xd0] sm:$0xff]
  %v105 = vld [vmem:[%s2 + $0xd8] sm:$0xff]
  %v106 = vld [vmem:[%s2 + $0xe0] sm:$0xff]
  %v107 = vld [vmem:[%s2 + $0xe8] sm:$0xff]
  %v108 = vld [vmem:[%s2 + $0xf0] sm:$0xff]
  %v109 = vld [vmem:[%s2 + $0xf8] sm:$0xff]
  %v142 = vunpack.c.l.b16 %v78
  %v143 = vunpack.c.h.b16 %v78
  %v144 = vunpack.c.l.b16 %v79
  %v145 = vunpack.c.h.b16 %v79
  %v146 = vunpack.c.l.b16 %v80
  %v147 = vunpack.c.h.b16 %v80
  %v148 = vunpack.c.l.b16 %v81
  %v149 = vunpack.c.h.b16 %v81
  %v150 = vunpack.c.l.b16 %v82
  %v151 = vunpack.c.h.b16 %v82
  %v152 = vunpack.c.l.b16 %v83
  %v153 = vunpack.c.h.b16 %v83
  %v154 = vunpack.c.l.b16 %v84
  %v155 = vunpack.c.h.b16 %v84
  %v156 = vunpack.c.l.b16 %v85
  %v157 = vunpack.c.h.b16 %v85
  %v158 = vunpack.c.l.b16 %v86
  %v159 = vunpack.c.h.b16 %v86
  %v160 = vunpack.c.l.b16 %v87
  %v161 = vunpack.c.h.b16 %v87
  %v162 = vunpack.c.l.b16 %v88
  %v163 = vunpack.c.h.b16 %v88
  %v164 = vunpack.c.l.b16 %v89
  %v165 = vunpack.c.h.b16 %v89
  %v166 = vunpack.c.l.b16 %v90
  %v167 = vunpack.c.h.b16 %v90
  %v168 = vunpack.c.l.b16 %v91
  %v169 = vunpack.c.h.b16 %v91
  %v170 = vunpack.c.l.b16 %v92
  %v171 = vunpack.c.h.b16 %v92
  %v172 = vunpack.c.l.b16 %v93
  %v173 = vunpack.c.h.b16 %v93
  %v174 = vunpack.c.l.b16 %v94
  %v175 = vunpack.c.h.b16 %v94
  %v176 = vunpack.c.l.b16 %v95
  %v177 = vunpack.c.h.b16 %v95
  %v178 = vunpack.c.l.b16 %v96
  %v179 = vunpack.c.h.b16 %v96
  %v180 = vunpack.c.l.b16 %v97
  %v181 = vunpack.c.h.b16 %v97
  %v182 = vunpack.c.l.b16 %v98
  %v183 = vunpack.c.h.b16 %v98
  %v184 = vunpack.c.l.b16 %v99
  %v185 = vunpack.c.h.b16 %v99
  %v186 = vunpack.c.l.b16 %v100
  %v187 = vunpack.c.h.b16 %v100
  %v188 = vunpack.c.l.b16 %v101
  %v189 = vunpack.c.h.b16 %v101
  %v190 = vunpack.c.l.b16 %v102
  %v191 = vunpack.c.h.b16 %v102
  %v192 = vunpack.c.l.b16 %v103
  %v193 = vunpack.c.h.b16 %v103
  %v194 = vunpack.c.l.b16 %v104
  %v195 = vunpack.c.h.b16 %v104
  %v196 = vunpack.c.l.b16 %v105
  %v197 = vunpack.c.h.b16 %v105
  %v198 = vunpack.c.l.b16 %v106
  %v199 = vunpack.c.h.b16 %v106
  %v200 = vunpack.c.l.b16 %v107
  %v201 = vunpack.c.h.b16 %v107
  %v202 = vunpack.c.l.b16 %v108
  %v203 = vunpack.c.h.b16 %v108
  %v204 = vunpack.c.l.b16 %v109
  %v205 = vunpack.c.h.b16 %v109
  %v206 = vpack.c.b16 %v146, %v142
  %v207 = vpack.c.b16 %v147, %v143
  %v208 = vpack.c.b16 %v148, %v144
  %v209 = vpack.c.b16 %v149, %v145
  %v210 = vpack.c.b16 %v154, %v150
  %v211 = vpack.c.b16 %v155, %v151
  %v212 = vpack.c.b16 %v156, %v152
  %v213 = vpack.c.b16 %v157, %v153
  %v214 = vpack.c.b16 %v162, %v158
  %v215 = vpack.c.b16 %v163, %v159
  %v216 = vpack.c.b16 %v164, %v160
  %v217 = vpack.c.b16 %v165, %v161
  %v218 = vpack.c.b16 %v170, %v166
  %v219 = vpack.c.b16 %v171, %v167
  %v220 = vpack.c.b16 %v172, %v168
  %v221 = vpack.c.b16 %v173, %v169
  %v222 = vpack.c.b16 %v178, %v174
  %v223 = vpack.c.b16 %v179, %v175
  %v224 = vpack.c.b16 %v180, %v176
  %v225 = vpack.c.b16 %v181, %v177
  %v226 = vpack.c.b16 %v186, %v182
  %v227 = vpack.c.b16 %v187, %v183
  %v228 = vpack.c.b16 %v188, %v184
  %v229 = vpack.c.b16 %v189, %v185
  %v230 = vpack.c.b16 %v194, %v190
  %v231 = vpack.c.b16 %v195, %v191
  %v232 = vpack.c.b16 %v196, %v192
  %v233 = vpack.c.b16 %v197, %v193
  %v234 = vpack.c.b16 %v202, %v198
  %v235 = vpack.c.b16 %v203, %v199
  %v236 = vpack.c.b16 %v204, %v200
  %v237 = vpack.c.b16 %v205, %v201
  %270 = vmatprep.subr.bf16.mxu0 %v207
  %271 = vmatpush1.bf16.msra.mxu0 %v206
  %272 = vmatprep.subr.bf16.mxu0 %v211
  %273 = vmatpush1.bf16.msra.mxu0 %v210
  %274 = vmatprep.subr.bf16.mxu0 %v215
  %275 = vmatpush1.bf16.msra.mxu0 %v214
  %276 = vmatprep.subr.bf16.mxu0 %v219
  %277 = vmatpush1.bf16.msra.mxu0 %v218
  %278 = vmatprep.subr.bf16.mxu0 %v223
  %279 = vmatpush1.bf16.msra.mxu0 %v222
  %280 = vmatprep.subr.bf16.mxu0 %v227
  %281 = vmatpush1.bf16.msra.mxu0 %v226
  %282 = vmatprep.subr.bf16.mxu0 %v231
  %283 = vmatpush1.bf16.msra.mxu0 %v230
  %284 = vmatprep.subr.bf16.mxu0 %v235
  %285 = vmatpush1.bf16.msra.mxu0 %v234
  %286 = vmatprep.subr.bf16.mxu0 0
  %287 = vmatpush1.bf16.msra.mxu0 0
  %288 = vmatprep.subr.bf16.mxu0 0
  %289 = vmatpush1.bf16.msra.mxu0 0
  %290 = vmatprep.subr.bf16.mxu0 0
  %291 = vmatpush1.bf16.msra.mxu0 0
  %292 = vmatprep.subr.bf16.mxu0 0
  %293 = vmatpush1.bf16.msra.mxu0 0
  %294 = vmatprep.subr.bf16.mxu0 0
  %295 = vmatpush1.bf16.msra.mxu0 0
  %296 = vmatprep.subr.bf16.mxu0 0
  %297 = vmatpush1.bf16.msra.mxu0 0
  %298 = vmatprep.subr.bf16.mxu0 0
  %299 = vmatpush1.bf16.msra.mxu0 0
  %300 = vmatprep.subr.bf16.mxu0 0
  %301 = vmatpush1.bf16.msra.mxu0 0
  %302 = vmatprep.mubr.bf16.mxu0 0
  %303 = vmatmul.mubr.bf16.gmra.mrb[0].mxu0 %v72
  %v304 = vpop.f32.mrb[0].mxu0
  %v305 = vadd.f32 0.0, %v304
  %v306 = vpop.f32.mrb[0].mxu0
  %v307 = vadd.f32 0.0, %v306
  %v308 = vpop.f32.mrb[0].mxu0
  %v309 = vpop.f32.mrb[0].mxu0
  %310 = vdwg.mxu0
  %311 = vmatprep.subr.bf16.mxu0 %v209
  %312 = vmatpush1.bf16.msra.mxu0 %v208
  %313 = vmatprep.subr.bf16.mxu0 %v213
  %314 = vmatpush1.bf16.msra.mxu0 %v212
  %315 = vmatprep.subr.bf16.mxu0 %v217
  %316 = vmatpush1.bf16.msra.mxu0 %v216
  %317 = vmatprep.subr.bf16.mxu0 %v221
  %318 = vmatpush1.bf16.msra.mxu0 %v220
  %319 = vmatprep.subr.bf16.mxu0 %v225
  %320 = vmatpush1.bf16.msra.mxu0 %v224
  %321 = vmatprep.subr.bf16.mxu0 %v229
  %322 = vmatpush1.bf16.msra.mxu0 %v228
  %323 = vmatprep.subr.bf16.mxu0 %v233
  %324 = vmatpush1.bf16.msra.mxu0 %v232
  %325 = vmatprep.subr.bf16.mxu0 %v237
  %326 = vmatpush1.bf16.msra.mxu0 %v236
  %327 = vmatprep.subr.bf16.mxu0 0
  %328 = vmatpush1.bf16.msra.mxu0 0
  %329 = vmatprep.subr.bf16.mxu0 0
  %330 = vmatpush1.bf16.msra.mxu0 0
  %331 = vmatprep.subr.bf16.mxu0 0
  %332 = vmatpush1.bf16.msra.mxu0 0
  %333 = vmatprep.subr.bf16.mxu0 0
  %334 = vmatpush1.bf16.msra.mxu0 0
  %335 = vmatprep.subr.bf16.mxu0 0
  %336 = vmatpush1.bf16.msra.mxu0 0
  %337 = vmatprep.subr.bf16.mxu0 0
  %338 = vmatpush1.bf16.msra.mxu0 0
  %339 = vmatprep.subr.bf16.mxu0 0
  %340 = vmatpush1.bf16.msra.mxu0 0
  %341 = vmatprep.subr.bf16.mxu0 0
  %342 = vmatpush1.bf16.msra.mxu0 0
  %343 = vmatprep.mubr.bf16.mxu0 0
  %344 = vmatmul.mubr.bf16.gmra.mrb[0].mxu0 %v72
  %v345 = vpop.f32.mrb[0].mxu0
  %v346 = vadd.f32 0.0, %v345
  %v347 = vpop.f32.mrb[0].mxu0
  %v348 = vadd.f32 0.0, %v347
  %v349 = vpop.f32.mrb[0].mxu0
  %v350 = vpop.f32.mrb[0].mxu0
  %351 = vdwg.mxu0
  %v352 = vadd.f32 %v74, %v305
  %v353 = vadd.f32 %v75, %v307
  %v354 = vadd.f32 %v76, %v346
  %v355 = vadd.f32 %v77, %v348
  %v356 = vxor.u32 %v352, 2147483648
  %v357 = vxor.u32 %v353, 2147483648
  %v358 = vxor.u32 %v354, 2147483648
  %v359 = vmul.f32 %v356, 1.442695
  %v360 = vpow.pop %v359
  %v361 = vmul.f32 %v357, 1.442695
  %v362 = vpow.pop %v361
  %v363 = vmul.f32 %v358, 1.442695
  %v364 = vpow.pop %v363
  %v365 = vadd.f32 %v360, 1.0
  %v366 = vadd.f32 %v362, 1.0
  %v367 = vadd.f32 %v364, 1.0
  %v368 = vrcp.pop %v365
  %v369 = vmul.f32 1.0, %v368
  %v370 = vrcp.pop %v366
  %v371 = vmul.f32 1.0, %v370
  %v372 = vrcp.pop %v367
  %v373 = vmul.f32 1.0, %v372
  %v374 = vtanh.pop %v355
  %v375 = vmul.f32 %v371, %v71
  %v376 = vmul.f32 %v369, %v374
  %v377 = vadd.f32 %v375, %v376
  %v378 = vtanh.pop %v377
  %v379 = vmul.f32 %v373, %v378
  %v380 = vsel %vm30, 1, 0
  %381 = vset.pattern.permute.xlu0 0
  %382 = vperm.xlu0 %381, %v380
  %v383 = vpop.permute.xlu0 %382
  %vm384 = vcmp.eq.s32.totalorder %v383, 1
  %v385 = vsel %vm384, %v379, %v70
  %v386 = vsel %vm384, %v377, %v71
  %v387 = vpack.c.bf16 %v385, %v385
  %s388 = scalar_lea.vmem %s0, 64
  %v389 = vld [vmem:[%s388] sm:$0xff]
  %v390 = vld [vmem:[%s388 + $0x8] sm:$0xff]
  %v391 = vld [vmem:[%s388 + $0x10] sm:$0xff]
  %v392 = vld [vmem:[%s388 + $0x18] sm:$0xff]
  %393 = vmatprep.subr.bf16.mxu0 %v207
  %394 = vmatpush1.bf16.msra.mxu0 %v206
  %395 = vmatprep.subr.bf16.mxu0 %v211
  %396 = vmatpush1.bf16.msra.mxu0 %v210
  %397 = vmatprep.subr.bf16.mxu0 %v215
  %398 = vmatpush1.bf16.msra.mxu0 %v214
  %399 = vmatprep.subr.bf16.mxu0 %v219
  %400 = vmatpush1.bf16.msra.mxu0 %v218
  %401 = vmatprep.subr.bf16.mxu0 %v223
  %402 = vmatpush1.bf16.msra.mxu0 %v222
  %403 = vmatprep.subr.bf16.mxu0 %v227
  %404 = vmatpush1.bf16.msra.mxu0 %v226
  %405 = vmatprep.subr.bf16.mxu0 %v231
  %406 = vmatpush1.bf16.msra.mxu0 %v230
  %407 = vmatprep.subr.bf16.mxu0 %v235
  %408 = vmatpush1.bf16.msra.mxu0 %v234
  %409 = vmatprep.subr.bf16.mxu0 0
  %410 = vmatpush1.bf16.msra.mxu0 0
  %411 = vmatprep.subr.bf16.mxu0 0
  %412 = vmatpush1.bf16.msra.mxu0 0
  %413 = vmatprep.subr.bf16.mxu0 0
  %414 = vmatpush1.bf16.msra.mxu0 0
  %415 = vmatprep.subr.bf16.mxu0 0
  %416 = vmatpush1.bf16.msra.mxu0 0
  %417 = vmatprep.subr.bf16.mxu0 0
  %418 = vmatpush1.bf16.msra.mxu0 0
  %419 = vmatprep.subr.bf16.mxu0 0
  %420 = vmatpush1.bf16.msra.mxu0 0
  %421 = vmatprep.subr.bf16.mxu0 0
  %422 = vmatpush1.bf16.msra.mxu0 0
  %423 = vmatprep.subr.bf16.mxu0 0
  %424 = vmatpush1.bf16.msra.mxu0 0
  %425 = vmatprep.mubr.bf16.mxu0 0
  %426 = vmatmul.mubr.bf16.gmra.mrb[0].mxu0 %v387
  %v427 = vpop.f32.mrb[0].mxu0
  %v428 = vadd.f32 0.0, %v427
  %v429 = vpop.f32.mrb[0].mxu0
  %v430 = vadd.f32 0.0, %v429
  %v431 = vpop.f32.mrb[0].mxu0
  %v432 = vpop.f32.mrb[0].mxu0
  %433 = vdwg.mxu0
  %434 = vmatprep.subr.bf16.mxu0 %v209
  %435 = vmatpush1.bf16.msra.mxu0 %v208
  %436 = vmatprep.subr.bf16.mxu0 %v213
  %437 = vmatpush1.bf16.msra.mxu0 %v212
  %438 = vmatprep.subr.bf16.mxu0 %v217
  %439 = vmatpush1.bf16.msra.mxu0 %v216
  %440 = vmatprep.subr.bf16.mxu0 %v221
  %441 = vmatpush1.bf16.msra.mxu0 %v220
  %442 = vmatprep.subr.bf16.mxu0 %v225
  %443 = vmatpush1.bf16.msra.mxu0 %v224
  %444 = vmatprep.subr.bf16.mxu0 %v229
  %445 = vmatpush1.bf16.msra.mxu0 %v228
  %446 = vmatprep.subr.bf16.mxu0 %v233
  %447 = vmatpush1.bf16.msra.mxu0 %v232
  %448 = vmatprep.subr.bf16.mxu0 %v237
  %449 = vmatpush1.bf16.msra.mxu0 %v236
  %450 = vmatprep.subr.bf16.mxu0 0
  %451 = vmatpush1.bf16.msra.mxu0 0
  %452 = vmatprep.subr.bf16.mxu0 0
  %453 = vmatpush1.bf16.msra.mxu0 0
  %454 = vmatprep.subr.bf16.mxu0 0
  %455 = vmatpush1.bf16.msra.mxu0 0
  %456 = vmatprep.subr.bf16.mxu0 0
  %457 = vmatpush1.bf16.msra.mxu0 0
  %458 = vmatprep.subr.bf16.mxu0 0
  %459 = vmatpush1.bf16.msra.mxu0 0
  %460 = vmatprep.subr.bf16.mxu0 0
  %461 = vmatpush1.bf16.msra.mxu0 0
  %462 = vmatprep.subr.bf16.mxu0 0
  %463 = vmatpush1.bf16.msra.mxu0 0
  %464 = vmatprep.subr.bf16.mxu0 0
  %465 = vmatpush1.bf16.msra.mxu0 0
  %466 = vmatprep.mubr.bf16.mxu0 0
  %467 = vmatmul.mubr.bf16.gmra.mrb[0].mxu0 %v387
  %v468 = vpop.f32.mrb[0].mxu0
  %v469 = vadd.f32 0.0, %v468
  %v470 = vpop.f32.mrb[0].mxu0
  %v471 = vadd.f32 0.0, %v470
  %v472 = vpop.f32.mrb[0].mxu0
  %v473 = vpop.f32.mrb[0].mxu0
  %474 = vdwg.mxu0
  %v475 = vadd.f32 %v389, %v428
  %v476 = vadd.f32 %v390, %v430
  %v477 = vadd.f32 %v391, %v469
  %v478 = vadd.f32 %v392, %v471
  %v479 = vxor.u32 %v475, 2147483648
  %v480 = vxor.u32 %v476, 2147483648
  %v481 = vxor.u32 %v477, 2147483648
  %v482 = vmul.f32 %v479, 1.442695
  %v483 = vpow.pop %v482
  %v484 = vmul.f32 %v480, 1.442695
  %v485 = vpow.pop %v484
  %v486 = vmul.f32 %v481, 1.442695
  %v487 = vpow.pop %v486
  %v488 = vadd.f32 %v483, 1.0
  %v489 = vadd.f32 %v485, 1.0
  %v490 = vadd.f32 %v487, 1.0
  %v491 = vrcp.pop %v488
  %v492 = vmul.f32 1.0, %v491
  %v493 = vrcp.pop %v489
  %v494 = vmul.f32 1.0, %v493
  %v495 = vrcp.pop %v490
  %v496 = vmul.f32 1.0, %v495
  %v497 = vtanh.pop %v478
  %v498 = vmul.f32 %v494, %v386
  %v499 = vmul.f32 %v492, %v497
  %v500 = vadd.f32 %v498, %v499
  %v501 = vtanh.pop %v500
  %v502 = vmul.f32 %v496, %v501
  %v503 = vsel %vm31, 1, 0
  %504 = vset.pattern.permute.xlu0 0
  %505 = vperm.xlu0 %504, %v503
  %v506 = vpop.permute.xlu0 %505
  %vm507 = vcmp.eq.s32.totalorder %v506, 1
  %v508 = vsel %vm507, %v502, %v385
  %v509 = vsel %vm507, %v500, %v386
  %v510 = vpack.c.bf16 %v508, %v508
  %s511 = scalar_lea.vmem %s0, 96
  %v512 = vld [vmem:[%s511] sm:$0xff]
  %v513 = vld [vmem:[%s511 + $0x8] sm:$0xff]
  %v514 = vld [vmem:[%s511 + $0x10] sm:$0xff]
  %v515 = vld [vmem:[%s511 + $0x18] sm:$0xff]
  %516 = vmatprep.subr.bf16.mxu0 %v207
  %517 = vmatpush1.bf16.msra.mxu0 %v206
  %518 = vmatprep.subr.bf16.mxu0 %v211
  %519 = vmatpush1.bf16.msra.mxu0 %v210
  %520 = vmatprep.subr.bf16.mxu0 %v215
  %521 = vmatpush1.bf16.msra.mxu0 %v214
  %522 = vmatprep.subr.bf16.mxu0 %v219
  %523 = vmatpush1.bf16.msra.mxu0 %v218
  %524 = vmatprep.subr.bf16.mxu0 %v223
  %525 = vmatpush1.bf16.msra.mxu0 %v222
  %526 = vmatprep.subr.bf16.mxu0 %v227
  %527 = vmatpush1.bf16.msra.mxu0 %v226
  %528 = vmatprep.subr.bf16.mxu0 %v231
  %529 = vmatpush1.bf16.msra.mxu0 %v230
  %530 = vmatprep.subr.bf16.mxu0 %v235
  %531 = vmatpush1.bf16.msra.mxu0 %v234
  %532 = vmatprep.subr.bf16.mxu0 0
  %533 = vmatpush1.bf16.msra.mxu0 0
  %534 = vmatprep.subr.bf16.mxu0 0
  %535 = vmatpush1.bf16.msra.mxu0 0
  %536 = vmatprep.subr.bf16.mxu0 0
  %537 = vmatpush1.bf16.msra.mxu0 0
  %538 = vmatprep.subr.bf16.mxu0 0
  %539 = vmatpush1.bf16.msra.mxu0 0
  %540 = vmatprep.subr.bf16.mxu0 0
  %541 = vmatpush1.bf16.msra.mxu0 0
  %542 = vmatprep.subr.bf16.mxu0 0
  %543 = vmatpush1.bf16.msra.mxu0 0
  %544 = vmatprep.subr.bf16.mxu0 0
  %545 = vmatpush1.bf16.msra.mxu0 0
  %546 = vmatprep.subr.bf16.mxu0 0
  %547 = vmatpush1.bf16.msra.mxu0 0
  %548 = vmatprep.mubr.bf16.mxu0 0
  %549 = vmatmul.mubr.bf16.gmra.mrb[0].mxu0 %v510
  %v550 = vpop.f32.mrb[0].mxu0
  %v551 = vadd.f32 0.0, %v550
  %v552 = vpop.f32.mrb[0].mxu0
  %v553 = vadd.f32 0.0, %v552
  %v554 = vpop.f32.mrb[0].mxu0
  %v555 = vpop.f32.mrb[0].mxu0
  %556 = vdwg.mxu0
  %557 = vmatprep.subr.bf16.mxu0 %v209
  %558 = vmatpush1.bf16.msra.mxu0 %v208
  %559 = vmatprep.subr.bf16.mxu0 %v213
  %560 = vmatpush1.bf16.msra.mxu0 %v212
  %561 = vmatprep.subr.bf16.mxu0 %v217
  %562 = vmatpush1.bf16.msra.mxu0 %v216
  %563 = vmatprep.subr.bf16.mxu0 %v221
  %564 = vmatpush1.bf16.msra.mxu0 %v220
  %565 = vmatprep.subr.bf16.mxu0 %v225
  %566 = vmatpush1.bf16.msra.mxu0 %v224
  %567 = vmatprep.subr.bf16.mxu0 %v229
  %568 = vmatpush1.bf16.msra.mxu0 %v228
  %569 = vmatprep.subr.bf16.mxu0 %v233
  %570 = vmatpush1.bf16.msra.mxu0 %v232
  %571 = vmatprep.subr.bf16.mxu0 %v237
  %572 = vmatpush1.bf16.msra.mxu0 %v236
  %573 = vmatprep.subr.bf16.mxu0 0
  %574 = vmatpush1.bf16.msra.mxu0 0
  %575 = vmatprep.subr.bf16.mxu0 0
  %576 = vmatpush1.bf16.msra.mxu0 0
  %577 = vmatprep.subr.bf16.mxu0 0
  %578 = vmatpush1.bf16.msra.mxu0 0
  %579 = vmatprep.subr.bf16.mxu0 0
  %580 = vmatpush1.bf16.msra.mxu0 0
  %581 = vmatprep.subr.bf16.mxu0 0
  %582 = vmatpush1.bf16.msra.mxu0 0
  %583 = vmatprep.subr.bf16.mxu0 0
  %584 = vmatpush1.bf16.msra.mxu0 0
  %585 = vmatprep.subr.bf16.mxu0 0
  %586 = vmatpush1.bf16.msra.mxu0 0
  %587 = vmatprep.subr.bf16.mxu0 0
  %588 = vmatpush1.bf16.msra.mxu0 0
  %589 = vmatprep.mubr.bf16.mxu0 0
  %590 = vmatmul.mubr.bf16.gmra.mrb[0].mxu0 %v510
  %v591 = vpop.f32.mrb[0].mxu0
  %v592 = vadd.f32 0.0, %v591
  %v593 = vpop.f32.mrb[0].mxu0
  %v594 = vadd.f32 0.0, %v593
  %v595 = vpop.f32.mrb[0].mxu0
  %v596 = vpop.f32.mrb[0].mxu0
  %597 = vdwg.mxu0
  %v598 = vadd.f32 %v512, %v551
  %v599 = vadd.f32 %v513, %v553
  %v600 = vadd.f32 %v514, %v592
  %v601 = vadd.f32 %v515, %v594
  %v602 = vxor.u32 %v598, 2147483648
  %v603 = vxor.u32 %v599, 2147483648
  %v604 = vxor.u32 %v600, 2147483648
  %v605 = vmul.f32 %v602, 1.442695
  %v606 = vpow.pop %v605
  %v607 = vmul.f32 %v603, 1.442695
  %v608 = vpow.pop %v607
  %v609 = vmul.f32 %v604, 1.442695
  %v610 = vpow.pop %v609
  %v611 = vadd.f32 %v606, 1.0
  %v612 = vadd.f32 %v608, 1.0
  %v613 = vadd.f32 %v610, 1.0
  %v614 = vrcp.pop %v611
  %v615 = vmul.f32 1.0, %v614
  %v616 = vrcp.pop %v612
  %v617 = vmul.f32 1.0, %v616
  %v618 = vrcp.pop %v613
  %v619 = vmul.f32 1.0, %v618
  %v620 = vtanh.pop %v601
  %v621 = vmul.f32 %v617, %v509
  %v622 = vmul.f32 %v615, %v620
  %v623 = vadd.f32 %v621, %v622
  %v624 = vtanh.pop %v623
  %v625 = vmul.f32 %v619, %v624
  %v626 = vsel %vm32, 1, 0
  %627 = vset.pattern.permute.xlu0 0
  %628 = vperm.xlu0 %627, %v626
  %v629 = vpop.permute.xlu0 %628
  %vm630 = vcmp.eq.s32.totalorder %v629, 1
  %v631 = vsel %vm630, %v625, %v508
  %v632 = vsel %vm630, %v623, %v509
  %v633 = vpack.c.bf16 %v631, %v631
  %s634 = scalar_lea.vmem %s0, 128
  %v635 = vld [vmem:[%s634] sm:$0xff]
  %v636 = vld [vmem:[%s634 + $0x8] sm:$0xff]
  %v637 = vld [vmem:[%s634 + $0x10] sm:$0xff]
  %v638 = vld [vmem:[%s634 + $0x18] sm:$0xff]
  %639 = vmatprep.subr.bf16.mxu0 %v207
  %640 = vmatpush1.bf16.msra.mxu0 %v206
  %641 = vmatprep.subr.bf16.mxu0 %v211
  %642 = vmatpush1.bf16.msra.mxu0 %v210
  %643 = vmatprep.subr.bf16.mxu0 %v215
  %644 = vmatpush1.bf16.msra.mxu0 %v214
  %645 = vmatprep.subr.bf16.mxu0 %v219
  %646 = vmatpush1.bf16.msra.mxu0 %v218
  %647 = vmatprep.subr.bf16.mxu0 %v223
  %648 = vmatpush1.bf16.msra.mxu0 %v222
  %649 = vmatprep.subr.bf16.mxu0 %v227
  %650 = vmatpush1.bf16.msra.mxu0 %v226
  %651 = vmatprep.subr.bf16.mxu0 %v231
  %652 = vmatpush1.bf16.msra.mxu0 %v230
  %653 = vmatprep.subr.bf16.mxu0 %v235
  %654 = vmatpush1.bf16.msra.mxu0 %v234
  %655 = vmatprep.subr.bf16.mxu0 0
  %656 = vmatpush1.bf16.msra.mxu0 0
  %657 = vmatprep.subr.bf16.mxu0 0
  %658 = vmatpush1.bf16.msra.mxu0 0
  %659 = vmatprep.subr.bf16.mxu0 0
  %660 = vmatpush1.bf16.msra.mxu0 0
  %661 = vmatprep.subr.bf16.mxu0 0
  %662 = vmatpush1.bf16.msra.mxu0 0
  %663 = vmatprep.subr.bf16.mxu0 0
  %664 = vmatpush1.bf16.msra.mxu0 0
  %665 = vmatprep.subr.bf16.mxu0 0
  %666 = vmatpush1.bf16.msra.mxu0 0
  %667 = vmatprep.subr.bf16.mxu0 0
  %668 = vmatpush1.bf16.msra.mxu0 0
  %669 = vmatprep.subr.bf16.mxu0 0
  %670 = vmatpush1.bf16.msra.mxu0 0
  %671 = vmatprep.mubr.bf16.mxu0 0
  %672 = vmatmul.mubr.bf16.gmra.mrb[0].mxu0 %v633
  %v673 = vpop.f32.mrb[0].mxu0
  %v674 = vadd.f32 0.0, %v673
  %v675 = vpop.f32.mrb[0].mxu0
  %v676 = vadd.f32 0.0, %v675
  %v677 = vpop.f32.mrb[0].mxu0
  %v678 = vpop.f32.mrb[0].mxu0
  %679 = vdwg.mxu0
  %680 = vmatprep.subr.bf16.mxu0 %v209
  %681 = vmatpush1.bf16.msra.mxu0 %v208
  %682 = vmatprep.subr.bf16.mxu0 %v213
  %683 = vmatpush1.bf16.msra.mxu0 %v212
  %684 = vmatprep.subr.bf16.mxu0 %v217
  %685 = vmatpush1.bf16.msra.mxu0 %v216
  %686 = vmatprep.subr.bf16.mxu0 %v221
  %687 = vmatpush1.bf16.msra.mxu0 %v220
  %688 = vmatprep.subr.bf16.mxu0 %v225
  %689 = vmatpush1.bf16.msra.mxu0 %v224
  %690 = vmatprep.subr.bf16.mxu0 %v229
  %691 = vmatpush1.bf16.msra.mxu0 %v228
  %692 = vmatprep.subr.bf16.mxu0 %v233
  %693 = vmatpush1.bf16.msra.mxu0 %v232
  %694 = vmatprep.subr.bf16.mxu0 %v237
  %695 = vmatpush1.bf16.msra.mxu0 %v236
  %696 = vmatprep.subr.bf16.mxu0 0
  %697 = vmatpush1.bf16.msra.mxu0 0
  %698 = vmatprep.subr.bf16.mxu0 0
  %699 = vmatpush1.bf16.msra.mxu0 0
  %700 = vmatprep.subr.bf16.mxu0 0
  %701 = vmatpush1.bf16.msra.mxu0 0
  %702 = vmatprep.subr.bf16.mxu0 0
  %703 = vmatpush1.bf16.msra.mxu0 0
  %704 = vmatprep.subr.bf16.mxu0 0
  %705 = vmatpush1.bf16.msra.mxu0 0
  %706 = vmatprep.subr.bf16.mxu0 0
  %707 = vmatpush1.bf16.msra.mxu0 0
  %708 = vmatprep.subr.bf16.mxu0 0
  %709 = vmatpush1.bf16.msra.mxu0 0
  %710 = vmatprep.subr.bf16.mxu0 0
  %711 = vmatpush1.bf16.msra.mxu0 0
  %712 = vmatprep.mubr.bf16.mxu0 0
  %713 = vmatmul.mubr.bf16.gmra.mrb[0].mxu0 %v633
  %v714 = vpop.f32.mrb[0].mxu0
  %v715 = vadd.f32 0.0, %v714
  %v716 = vpop.f32.mrb[0].mxu0
  %v717 = vadd.f32 0.0, %v716
  %v718 = vpop.f32.mrb[0].mxu0
  %v719 = vpop.f32.mrb[0].mxu0
  %720 = vdwg.mxu0
  %v721 = vadd.f32 %v635, %v674
  %v722 = vadd.f32 %v636, %v676
  %v723 = vadd.f32 %v637, %v715
  %v724 = vadd.f32 %v638, %v717
  %v725 = vxor.u32 %v721, 2147483648
  %v726 = vxor.u32 %v722, 2147483648
  %v727 = vxor.u32 %v723, 2147483648
  %v728 = vmul.f32 %v725, 1.442695
  %v729 = vpow.pop %v728
  %v730 = vmul.f32 %v726, 1.442695
  %v731 = vpow.pop %v730
  %v732 = vmul.f32 %v727, 1.442695
  %v733 = vpow.pop %v732
  %v734 = vadd.f32 %v729, 1.0
  %v735 = vadd.f32 %v731, 1.0
  %v736 = vadd.f32 %v733, 1.0
  %v737 = vrcp.pop %v734
  %v738 = vmul.f32 1.0, %v737
  %v739 = vrcp.pop %v735
  %v740 = vmul.f32 1.0, %v739
  %v741 = vrcp.pop %v736
  %v742 = vmul.f32 1.0, %v741
  %v743 = vtanh.pop %v724
  %v744 = vmul.f32 %v740, %v632
  %v745 = vmul.f32 %v738, %v743
  %v746 = vadd.f32 %v744, %v745
  %v747 = vtanh.pop %v746
  %v748 = vmul.f32 %v742, %v747
  %v749 = vsel %vm33, 1, 0
  %750 = vset.pattern.permute.xlu0 0
  %751 = vperm.xlu0 %750, %v749
  %v752 = vpop.permute.xlu0 %751
  %vm753 = vcmp.eq.s32.totalorder %v752, 1
  %v754 = vsel %vm753, %v748, %v631
  %v755 = vsel %vm753, %v746, %v632
  %v756 = vpack.c.bf16 %v754, %v754
  %s757 = scalar_lea.vmem %s0, 160
  %v758 = vld [vmem:[%s757] sm:$0xff]
  %v759 = vld [vmem:[%s757 + $0x8] sm:$0xff]
  %v760 = vld [vmem:[%s757 + $0x10] sm:$0xff]
  %v761 = vld [vmem:[%s757 + $0x18] sm:$0xff]
  %762 = vmatprep.subr.bf16.mxu0 %v207
  %763 = vmatpush1.bf16.msra.mxu0 %v206
  %764 = vmatprep.subr.bf16.mxu0 %v211
  %765 = vmatpush1.bf16.msra.mxu0 %v210
  %766 = vmatprep.subr.bf16.mxu0 %v215
  %767 = vmatpush1.bf16.msra.mxu0 %v214
  %768 = vmatprep.subr.bf16.mxu0 %v219
  %769 = vmatpush1.bf16.msra.mxu0 %v218
  %770 = vmatprep.subr.bf16.mxu0 %v223
  %771 = vmatpush1.bf16.msra.mxu0 %v222
  %772 = vmatprep.subr.bf16.mxu0 %v227
  %773 = vmatpush1.bf16.msra.mxu0 %v226
  %774 = vmatprep.subr.bf16.mxu0 %v231
  %775 = vmatpush1.bf16.msra.mxu0 %v230
  %776 = vmatprep.subr.bf16.mxu0 %v235
  %777 = vmatpush1.bf16.msra.mxu0 %v234
  %778 = vmatprep.subr.bf16.mxu0 0
  %779 = vmatpush1.bf16.msra.mxu0 0
  %780 = vmatprep.subr.bf16.mxu0 0
  %781 = vmatpush1.bf16.msra.mxu0 0
  %782 = vmatprep.subr.bf16.mxu0 0
  %783 = vmatpush1.bf16.msra.mxu0 0
  %784 = vmatprep.subr.bf16.mxu0 0
  %785 = vmatpush1.bf16.msra.mxu0 0
  %786 = vmatprep.subr.bf16.mxu0 0
  %787 = vmatpush1.bf16.msra.mxu0 0
  %788 = vmatprep.subr.bf16.mxu0 0
  %789 = vmatpush1.bf16.msra.mxu0 0
  %790 = vmatprep.subr.bf16.mxu0 0
  %791 = vmatpush1.bf16.msra.mxu0 0
  %792 = vmatprep.subr.bf16.mxu0 0
  %793 = vmatpush1.bf16.msra.mxu0 0
  %794 = vmatprep.mubr.bf16.mxu0 0
  %795 = vmatmul.mubr.bf16.gmra.mrb[0].mxu0 %v756
  %v796 = vpop.f32.mrb[0].mxu0
  %v797 = vadd.f32 0.0, %v796
  %v798 = vpop.f32.mrb[0].mxu0
  %v799 = vadd.f32 0.0, %v798
  %v800 = vpop.f32.mrb[0].mxu0
  %v801 = vpop.f32.mrb[0].mxu0
  %802 = vdwg.mxu0
  %803 = vmatprep.subr.bf16.mxu0 %v209
  %804 = vmatpush1.bf16.msra.mxu0 %v208
  %805 = vmatprep.subr.bf16.mxu0 %v213
  %806 = vmatpush1.bf16.msra.mxu0 %v212
  %807 = vmatprep.subr.bf16.mxu0 %v217
  %808 = vmatpush1.bf16.msra.mxu0 %v216
  %809 = vmatprep.subr.bf16.mxu0 %v221
  %810 = vmatpush1.bf16.msra.mxu0 %v220
  %811 = vmatprep.subr.bf16.mxu0 %v225
  %812 = vmatpush1.bf16.msra.mxu0 %v224
  %813 = vmatprep.subr.bf16.mxu0 %v229
  %814 = vmatpush1.bf16.msra.mxu0 %v228
  %815 = vmatprep.subr.bf16.mxu0 %v233
  %816 = vmatpush1.bf16.msra.mxu0 %v232
  %817 = vmatprep.subr.bf16.mxu0 %v237
  %818 = vmatpush1.bf16.msra.mxu0 %v236
  %819 = vmatprep.subr.bf16.mxu0 0
  %820 = vmatpush1.bf16.msra.mxu0 0
  %821 = vmatprep.subr.bf16.mxu0 0
  %822 = vmatpush1.bf16.msra.mxu0 0
  %823 = vmatprep.subr.bf16.mxu0 0
  %824 = vmatpush1.bf16.msra.mxu0 0
  %825 = vmatprep.subr.bf16.mxu0 0
  %826 = vmatpush1.bf16.msra.mxu0 0
  %827 = vmatprep.subr.bf16.mxu0 0
  %828 = vmatpush1.bf16.msra.mxu0 0
  %829 = vmatprep.subr.bf16.mxu0 0
  %830 = vmatpush1.bf16.msra.mxu0 0
  %831 = vmatprep.subr.bf16.mxu0 0
  %832 = vmatpush1.bf16.msra.mxu0 0
  %833 = vmatprep.subr.bf16.mxu0 0
  %834 = vmatpush1.bf16.msra.mxu0 0
  %835 = vmatprep.mubr.bf16.mxu0 0
  %836 = vmatmul.mubr.bf16.gmra.mrb[0].mxu0 %v756
  %v837 = vpop.f32.mrb[0].mxu0
  %v838 = vadd.f32 0.0, %v837
  %v839 = vpop.f32.mrb[0].mxu0
  %v840 = vadd.f32 0.0, %v839
  %v841 = vpop.f32.mrb[0].mxu0
  %v842 = vpop.f32.mrb[0].mxu0
  %843 = vdwg.mxu0
  %v844 = vadd.f32 %v758, %v797
  %v845 = vadd.f32 %v759, %v799
  %v846 = vadd.f32 %v760, %v838
  %v847 = vadd.f32 %v761, %v840
  %v848 = vxor.u32 %v844, 2147483648
  %v849 = vxor.u32 %v845, 2147483648
  %v850 = vxor.u32 %v846, 2147483648
  %v851 = vmul.f32 %v848, 1.442695
  %v852 = vpow.pop %v851
  %v853 = vmul.f32 %v849, 1.442695
  %v854 = vpow.pop %v853
  %v855 = vmul.f32 %v850, 1.442695
  %v856 = vpow.pop %v855
  %v857 = vadd.f32 %v852, 1.0
  %v858 = vadd.f32 %v854, 1.0
  %v859 = vadd.f32 %v856, 1.0
  %v860 = vrcp.pop %v857
  %v861 = vmul.f32 1.0, %v860
  %v862 = vrcp.pop %v858
  %v863 = vmul.f32 1.0, %v862
  %v864 = vrcp.pop %v859
  %v865 = vmul.f32 1.0, %v864
  %v866 = vtanh.pop %v847
  %v867 = vmul.f32 %v863, %v755
  %v868 = vmul.f32 %v861, %v866
  %v869 = vadd.f32 %v867, %v868
  %v870 = vtanh.pop %v869
  %v871 = vmul.f32 %v865, %v870
  %v872 = vsel %vm34, 1, 0
  %873 = vset.pattern.permute.xlu0 0
  %874 = vperm.xlu0 %873, %v872
  %v875 = vpop.permute.xlu0 %874
  %vm876 = vcmp.eq.s32.totalorder %v875, 1
  %v877 = vsel %vm876, %v871, %v754
  %v878 = vsel %vm876, %v869, %v755
  %v879 = vpack.c.bf16 %v877, %v877
  %s880 = scalar_lea.vmem %s0, 192
  %v881 = vld [vmem:[%s880] sm:$0xff]
  %v882 = vld [vmem:[%s880 + $0x8] sm:$0xff]
  %v883 = vld [vmem:[%s880 + $0x10] sm:$0xff]
  %v884 = vld [vmem:[%s880 + $0x18] sm:$0xff]
  %885 = vmatprep.subr.bf16.mxu0 %v207
  %886 = vmatpush1.bf16.msra.mxu0 %v206
  %887 = vmatprep.subr.bf16.mxu0 %v211
  %888 = vmatpush1.bf16.msra.mxu0 %v210
  %889 = vmatprep.subr.bf16.mxu0 %v215
  %890 = vmatpush1.bf16.msra.mxu0 %v214
  %891 = vmatprep.subr.bf16.mxu0 %v219
  %892 = vmatpush1.bf16.msra.mxu0 %v218
  %893 = vmatprep.subr.bf16.mxu0 %v223
  %894 = vmatpush1.bf16.msra.mxu0 %v222
  %895 = vmatprep.subr.bf16.mxu0 %v227
  %896 = vmatpush1.bf16.msra.mxu0 %v226
  %897 = vmatprep.subr.bf16.mxu0 %v231
  %898 = vmatpush1.bf16.msra.mxu0 %v230
  %899 = vmatprep.subr.bf16.mxu0 %v235
  %900 = vmatpush1.bf16.msra.mxu0 %v234
  %901 = vmatprep.subr.bf16.mxu0 0
  %902 = vmatpush1.bf16.msra.mxu0 0
  %903 = vmatprep.subr.bf16.mxu0 0
  %904 = vmatpush1.bf16.msra.mxu0 0
  %905 = vmatprep.subr.bf16.mxu0 0
  %906 = vmatpush1.bf16.msra.mxu0 0
  %907 = vmatprep.subr.bf16.mxu0 0
  %908 = vmatpush1.bf16.msra.mxu0 0
  %909 = vmatprep.subr.bf16.mxu0 0
  %910 = vmatpush1.bf16.msra.mxu0 0
  %911 = vmatprep.subr.bf16.mxu0 0
  %912 = vmatpush1.bf16.msra.mxu0 0
  %913 = vmatprep.subr.bf16.mxu0 0
  %914 = vmatpush1.bf16.msra.mxu0 0
  %915 = vmatprep.subr.bf16.mxu0 0
  %916 = vmatpush1.bf16.msra.mxu0 0
  %917 = vmatprep.mubr.bf16.mxu0 0
  %918 = vmatmul.mubr.bf16.gmra.mrb[0].mxu0 %v879
  %v919 = vpop.f32.mrb[0].mxu0
  %v920 = vadd.f32 0.0, %v919
  %v921 = vpop.f32.mrb[0].mxu0
  %v922 = vadd.f32 0.0, %v921
  %v923 = vpop.f32.mrb[0].mxu0
  %v924 = vpop.f32.mrb[0].mxu0
  %925 = vdwg.mxu0
  %926 = vmatprep.subr.bf16.mxu0 %v209
  %927 = vmatpush1.bf16.msra.mxu0 %v208
  %928 = vmatprep.subr.bf16.mxu0 %v213
  %929 = vmatpush1.bf16.msra.mxu0 %v212
  %930 = vmatprep.subr.bf16.mxu0 %v217
  %931 = vmatpush1.bf16.msra.mxu0 %v216
  %932 = vmatprep.subr.bf16.mxu0 %v221
  %933 = vmatpush1.bf16.msra.mxu0 %v220
  %934 = vmatprep.subr.bf16.mxu0 %v225
  %935 = vmatpush1.bf16.msra.mxu0 %v224
  %936 = vmatprep.subr.bf16.mxu0 %v229
  %937 = vmatpush1.bf16.msra.mxu0 %v228
  %938 = vmatprep.subr.bf16.mxu0 %v233
  %939 = vmatpush1.bf16.msra.mxu0 %v232
  %940 = vmatprep.subr.bf16.mxu0 %v237
  %941 = vmatpush1.bf16.msra.mxu0 %v236
  %942 = vmatprep.subr.bf16.mxu0 0
  %943 = vmatpush1.bf16.msra.mxu0 0
  %944 = vmatprep.subr.bf16.mxu0 0
  %945 = vmatpush1.bf16.msra.mxu0 0
  %946 = vmatprep.subr.bf16.mxu0 0
  %947 = vmatpush1.bf16.msra.mxu0 0
  %948 = vmatprep.subr.bf16.mxu0 0
  %949 = vmatpush1.bf16.msra.mxu0 0
  %950 = vmatprep.subr.bf16.mxu0 0
  %951 = vmatpush1.bf16.msra.mxu0 0
  %952 = vmatprep.subr.bf16.mxu0 0
  %953 = vmatpush1.bf16.msra.mxu0 0
  %954 = vmatprep.subr.bf16.mxu0 0
  %955 = vmatpush1.bf16.msra.mxu0 0
  %956 = vmatprep.subr.bf16.mxu0 0
  %957 = vmatpush1.bf16.msra.mxu0 0
  %958 = vmatprep.mubr.bf16.mxu0 0
  %959 = vmatmul.mubr.bf16.gmra.mrb[0].mxu0 %v879
  %v960 = vpop.f32.mrb[0].mxu0
  %v961 = vadd.f32 0.0, %v960
  %v962 = vpop.f32.mrb[0].mxu0
  %v963 = vadd.f32 0.0, %v962
  %v964 = vpop.f32.mrb[0].mxu0
  %v965 = vpop.f32.mrb[0].mxu0
  %966 = vdwg.mxu0
  %v967 = vadd.f32 %v881, %v920
  %v968 = vadd.f32 %v882, %v922
  %v969 = vadd.f32 %v883, %v961
  %v970 = vadd.f32 %v884, %v963
  %v971 = vxor.u32 %v967, 2147483648
  %v972 = vxor.u32 %v968, 2147483648
  %v973 = vxor.u32 %v969, 2147483648
  %v974 = vmul.f32 %v971, 1.442695
  %v975 = vpow.pop %v974
  %v976 = vmul.f32 %v972, 1.442695
  %v977 = vpow.pop %v976
  %v978 = vmul.f32 %v973, 1.442695
  %v979 = vpow.pop %v978
  %v980 = vadd.f32 %v975, 1.0
  %v981 = vadd.f32 %v977, 1.0
  %v982 = vadd.f32 %v979, 1.0
  %v983 = vrcp.pop %v980
  %v984 = vmul.f32 1.0, %v983
  %v985 = vrcp.pop %v981
  %v986 = vmul.f32 1.0, %v985
  %v987 = vrcp.pop %v982
  %v988 = vmul.f32 1.0, %v987
  %v989 = vtanh.pop %v970
  %v990 = vmul.f32 %v986, %v878
  %v991 = vmul.f32 %v984, %v989
  %v992 = vadd.f32 %v990, %v991
  %v993 = vtanh.pop %v992
  %v994 = vmul.f32 %v988, %v993
  %v995 = vsel %vm35, 1, 0
  %996 = vset.pattern.permute.xlu0 0
  %997 = vperm.xlu0 %996, %v995
  %v998 = vpop.permute.xlu0 %997
  %vm999 = vcmp.eq.s32.totalorder %v998, 1
  %v1000 = vsel %vm999, %v994, %v877
  %v1001 = vsel %vm999, %v992, %v878
  %v1002 = vpack.c.bf16 %v1000, %v1000
  %s1003 = scalar_lea.vmem %s0, 224
  %v1004 = vld [vmem:[%s1003] sm:$0xff]
  %v1005 = vld [vmem:[%s1003 + $0x8] sm:$0xff]
  %v1006 = vld [vmem:[%s1003 + $0x10] sm:$0xff]
  %v1007 = vld [vmem:[%s1003 + $0x18] sm:$0xff]
  %1008 = vmatprep.subr.bf16.mxu0 %v207
  %1009 = vmatpush1.bf16.msra.mxu0 %v206
  %1010 = vmatprep.subr.bf16.mxu0 %v211
  %1011 = vmatpush1.bf16.msra.mxu0 %v210
  %1012 = vmatprep.subr.bf16.mxu0 %v215
  %1013 = vmatpush1.bf16.msra.mxu0 %v214
  %1014 = vmatprep.subr.bf16.mxu0 %v219
  %1015 = vmatpush1.bf16.msra.mxu0 %v218
  %1016 = vmatprep.subr.bf16.mxu0 %v223
  %1017 = vmatpush1.bf16.msra.mxu0 %v222
  %1018 = vmatprep.subr.bf16.mxu0 %v227
  %1019 = vmatpush1.bf16.msra.mxu0 %v226
  %1020 = vmatprep.subr.bf16.mxu0 %v231
  %1021 = vmatpush1.bf16.msra.mxu0 %v230
  %1022 = vmatprep.subr.bf16.mxu0 %v235
  %1023 = vmatpush1.bf16.msra.mxu0 %v234
  %1024 = vmatprep.subr.bf16.mxu0 0
  %1025 = vmatpush1.bf16.msra.mxu0 0
  %1026 = vmatprep.subr.bf16.mxu0 0
  %1027 = vmatpush1.bf16.msra.mxu0 0
  %1028 = vmatprep.subr.bf16.mxu0 0
  %1029 = vmatpush1.bf16.msra.mxu0 0
  %1030 = vmatprep.subr.bf16.mxu0 0
  %1031 = vmatpush1.bf16.msra.mxu0 0
  %1032 = vmatprep.subr.bf16.mxu0 0
  %1033 = vmatpush1.bf16.msra.mxu0 0
  %1034 = vmatprep.subr.bf16.mxu0 0
  %1035 = vmatpush1.bf16.msra.mxu0 0
  %1036 = vmatprep.subr.bf16.mxu0 0
  %1037 = vmatpush1.bf16.msra.mxu0 0
  %1038 = vmatprep.subr.bf16.mxu0 0
  %1039 = vmatpush1.bf16.msra.mxu0 0
  %1040 = vmatprep.mubr.bf16.mxu0 0
  %1041 = vmatmul.mubr.bf16.gmra.mrb[0].mxu0 %v1002
  %v1042 = vpop.f32.mrb[0].mxu0
  %v1043 = vadd.f32 0.0, %v1042
  %v1044 = vpop.f32.mrb[0].mxu0
  %v1045 = vadd.f32 0.0, %v1044
  %v1046 = vpop.f32.mrb[0].mxu0
  %v1047 = vpop.f32.mrb[0].mxu0
  %1048 = vdwg.mxu0
  %1049 = vmatprep.subr.bf16.mxu0 %v209
  %1050 = vmatpush1.bf16.msra.mxu0 %v208
  %1051 = vmatprep.subr.bf16.mxu0 %v213
  %1052 = vmatpush1.bf16.msra.mxu0 %v212
  %1053 = vmatprep.subr.bf16.mxu0 %v217
  %1054 = vmatpush1.bf16.msra.mxu0 %v216
  %1055 = vmatprep.subr.bf16.mxu0 %v221
  %1056 = vmatpush1.bf16.msra.mxu0 %v220
  %1057 = vmatprep.subr.bf16.mxu0 %v225
  %1058 = vmatpush1.bf16.msra.mxu0 %v224
  %1059 = vmatprep.subr.bf16.mxu0 %v229
  %1060 = vmatpush1.bf16.msra.mxu0 %v228
  %1061 = vmatprep.subr.bf16.mxu0 %v233
  %1062 = vmatpush1.bf16.msra.mxu0 %v232
  %1063 = vmatprep.subr.bf16.mxu0 %v237
  %1064 = vmatpush1.bf16.msra.mxu0 %v236
  %1065 = vmatprep.subr.bf16.mxu0 0
  %1066 = vmatpush1.bf16.msra.mxu0 0
  %1067 = vmatprep.subr.bf16.mxu0 0
  %1068 = vmatpush1.bf16.msra.mxu0 0
  %1069 = vmatprep.subr.bf16.mxu0 0
  %1070 = vmatpush1.bf16.msra.mxu0 0
  %1071 = vmatprep.subr.bf16.mxu0 0
  %1072 = vmatpush1.bf16.msra.mxu0 0
  %1073 = vmatprep.subr.bf16.mxu0 0
  %1074 = vmatpush1.bf16.msra.mxu0 0
  %1075 = vmatprep.subr.bf16.mxu0 0
  %1076 = vmatpush1.bf16.msra.mxu0 0
  %1077 = vmatprep.subr.bf16.mxu0 0
  %1078 = vmatpush1.bf16.msra.mxu0 0
  %1079 = vmatprep.subr.bf16.mxu0 0
  %1080 = vmatpush1.bf16.msra.mxu0 0
  %1081 = vmatprep.mubr.bf16.mxu0 0
  %1082 = vmatmul.mubr.bf16.gmra.mrb[0].mxu0 %v1002
  %v1083 = vpop.f32.mrb[0].mxu0
  %v1084 = vadd.f32 0.0, %v1083
  %v1085 = vpop.f32.mrb[0].mxu0
  %v1086 = vadd.f32 0.0, %v1085
  %v1087 = vpop.f32.mrb[0].mxu0
  %v1088 = vpop.f32.mrb[0].mxu0
  %1089 = vdwg.mxu0
  %v1090 = vadd.f32 %v1004, %v1043
  %v1091 = vadd.f32 %v1005, %v1045
  %v1092 = vadd.f32 %v1006, %v1084
  %v1093 = vadd.f32 %v1007, %v1086
  %v1094 = vxor.u32 %v1090, 2147483648
  %v1095 = vxor.u32 %v1091, 2147483648
  %v1096 = vxor.u32 %v1092, 2147483648
  %v1097 = vmul.f32 %v1094, 1.442695
  %v1098 = vpow.pop %v1097
  %v1099 = vmul.f32 %v1095, 1.442695
  %v1100 = vpow.pop %v1099
  %v1101 = vmul.f32 %v1096, 1.442695
  %v1102 = vpow.pop %v1101
  %v1103 = vadd.f32 %v1098, 1.0
  %v1104 = vadd.f32 %v1100, 1.0
  %v1105 = vadd.f32 %v1102, 1.0
  %v1106 = vrcp.pop %v1103
  %v1107 = vmul.f32 1.0, %v1106
  %v1108 = vrcp.pop %v1104
  %v1109 = vmul.f32 1.0, %v1108
  %v1110 = vrcp.pop %v1105
  %v1111 = vmul.f32 1.0, %v1110
  %v1112 = vtanh.pop %v1093
  %v1113 = vmul.f32 %v1109, %v1001
  %v1114 = vmul.f32 %v1107, %v1112
  %v1115 = vadd.f32 %v1113, %v1114
  %v1116 = vtanh.pop %v1115
  %v1117 = vmul.f32 %v1111, %v1116
  %v1118 = vsel %vm36, 1, 0
  %1119 = vset.pattern.permute.xlu0 0
  %1120 = vperm.xlu0 %1119, %v1118
  %v1121 = vpop.permute.xlu0 %1120
  %vm1122 = vcmp.eq.s32.totalorder %v1121, 1
  %v1123 = vsel %vm1122, %v1117, %v1000
  %v1124 = vpack.c.bf16 %v1123, %v1123
  %v1125 = vld [vmem:[%s3] sm:$0xf]
  %v1126 = vld [vmem:[%s3 + $0x4] sm:$0xf]
  %v1127 = vld [vmem:[%s3 + $0x8] sm:$0xf]
  %v1128 = vld [vmem:[%s3 + $0xc] sm:$0xf]
  %v1129 = vld [vmem:[%s3 + $0x10] sm:$0xf]
  %v1130 = vld [vmem:[%s3 + $0x14] sm:$0xf]
  %v1131 = vld [vmem:[%s3 + $0x18] sm:$0xf]
  %v1132 = vld [vmem:[%s3 + $0x1c] sm:$0xf]
  %v1133 = vld [vmem:[%s3 + $0x20] sm:$0xf]
  %v1134 = vld [vmem:[%s3 + $0x24] sm:$0xf]
  %v1135 = vld [vmem:[%s3 + $0x28] sm:$0xf]
  %v1136 = vld [vmem:[%s3 + $0x2c] sm:$0xf]
  %v1137 = vld [vmem:[%s3 + $0x30] sm:$0xf]
  %v1138 = vld [vmem:[%s3 + $0x34] sm:$0xf]
  %v1139 = vld [vmem:[%s3 + $0x38] sm:$0xf]
  %v1140 = vld [vmem:[%s3 + $0x3c] sm:$0xf]
  %v1141 = vld [vmem:[%s4] sm:$0x1]
  %v1143 = vlaneseq
  %v1144 = vshrl.u32 %v1143, 7
  %v1145 = vsub.s32 0, %v1144
  %v1146 = vrot.slane %v1141, %v1145
  %v1164 = vunpack.c.l.b16 %v1125
  %v1165 = vunpack.c.l.b16 %v1126
  %v1166 = vunpack.c.l.b16 %v1127
  %v1167 = vunpack.c.l.b16 %v1128
  %v1168 = vunpack.c.l.b16 %v1129
  %v1169 = vunpack.c.l.b16 %v1130
  %v1170 = vunpack.c.l.b16 %v1131
  %v1171 = vunpack.c.l.b16 %v1132
  %v1172 = vunpack.c.l.b16 %v1133
  %v1173 = vunpack.c.l.b16 %v1134
  %v1174 = vunpack.c.l.b16 %v1135
  %v1175 = vunpack.c.l.b16 %v1136
  %v1176 = vunpack.c.l.b16 %v1137
  %v1177 = vunpack.c.l.b16 %v1138
  %v1178 = vunpack.c.l.b16 %v1139
  %v1179 = vunpack.c.l.b16 %v1140
  %v1180 = vpack.c.b16 %v1165, %v1164
  %v1181 = vpack.c.b16 %v1167, %v1166
  %v1182 = vpack.c.b16 %v1169, %v1168
  %v1183 = vpack.c.b16 %v1171, %v1170
  %v1184 = vpack.c.b16 %v1173, %v1172
  %v1185 = vpack.c.b16 %v1175, %v1174
  %v1186 = vpack.c.b16 %v1177, %v1176
  %v1187 = vpack.c.b16 %v1179, %v1178
  %1196 = vmatprep.subr.bf16.mxu0 0
  %1197 = vmatpush1.bf16.msra.mxu0 %v1180
  %1198 = vmatprep.subr.bf16.mxu0 0
  %1199 = vmatpush1.bf16.msra.mxu0 %v1181
  %1200 = vmatprep.subr.bf16.mxu0 0
  %1201 = vmatpush1.bf16.msra.mxu0 %v1182
  %1202 = vmatprep.subr.bf16.mxu0 0
  %1203 = vmatpush1.bf16.msra.mxu0 %v1183
  %1204 = vmatprep.subr.bf16.mxu0 0
  %1205 = vmatpush1.bf16.msra.mxu0 %v1184
  %1206 = vmatprep.subr.bf16.mxu0 0
  %1207 = vmatpush1.bf16.msra.mxu0 %v1185
  %1208 = vmatprep.subr.bf16.mxu0 0
  %1209 = vmatpush1.bf16.msra.mxu0 %v1186
  %1210 = vmatprep.subr.bf16.mxu0 0
  %1211 = vmatpush1.bf16.msra.mxu0 %v1187
  %1212 = vmatprep.subr.bf16.mxu0 0
  %1213 = vmatpush1.bf16.msra.mxu0 0
  %1214 = vmatprep.subr.bf16.mxu0 0
  %1215 = vmatpush1.bf16.msra.mxu0 0
  %1216 = vmatprep.subr.bf16.mxu0 0
  %1217 = vmatpush1.bf16.msra.mxu0 0
  %1218 = vmatprep.subr.bf16.mxu0 0
  %1219 = vmatpush1.bf16.msra.mxu0 0
  %1220 = vmatprep.subr.bf16.mxu0 0
  %1221 = vmatpush1.bf16.msra.mxu0 0
  %1222 = vmatprep.subr.bf16.mxu0 0
  %1223 = vmatpush1.bf16.msra.mxu0 0
  %1224 = vmatprep.subr.bf16.mxu0 0
  %1225 = vmatpush1.bf16.msra.mxu0 0
  %1226 = vmatprep.subr.bf16.mxu0 0
  %1227 = vmatpush1.bf16.msra.mxu0 0
  %1228 = vmatprep.mubr.bf16.mxu0 0
  %1229 = vmatmul.mubr.bf16.gmra.mrb[0].mxu0 %v1124
  %v1230 = vpop.f32.mrb[0].mxu0
  %v1231 = vadd.f32 %v1146, %v1230
  %v1232 = vpop.f32.mrb[0].mxu0
  %v1233 = vpop.f32.mrb[0].mxu0
  %v1234 = vpop.f32.mrb[0].mxu0
  %1235 = vdwg.mxu0
  %v1236 = vsel %vm69, %v1231, 0.0
  %1237 = vst [vmem:[%s5] sm:$0xff] %v1236
  // Predicated region
  $region22: #{_policy_forward_jit.1} parent=0 // pred_check
    _
  $region23: #{_policy_forward_jit.1} parent=0 // pred_check_branch
    %1239 = sbr.rel (0) target = $region25
  $region24: #{_policy_forward_jit.1} parent=0 // pred_region
    _
  $region25: #{_policy_forward_jit.1} parent=0 // pred_fallthru
    _
  // Predicated region
  $region26: #{_policy_forward_jit.1} parent=0 // pred_check
    _
  $region27: #{_policy_forward_jit.1} parent=0 // pred_check_branch
    %1241 = sbr.rel (0) target = $region29
  $region28: #{_policy_forward_jit.1} parent=0 // pred_region
    _
  $region29: #{_policy_forward_jit.1} parent=0 // pred_fallthru
    _

</llo_original>
